<compile_context>
chip_gen: v7x
topology: tpu7x:2x2x1
jax: 0.10.0
libtpu: 0.0.40
codegen_flags: <defaults>
</compile_context>

<pallas_src>
import jax
import jax.numpy as jnp
import numpy as np
from jax import lax
from jax.experimental import pallas as pl
from jax.experimental.pallas import tpu as pltpu

# ---- small synthetic hyper-parameters (consistent with the module __init__) ----
EMBED_DIM = 32
FF_DIM = 64
NUM_HEADS = 4
HEAD_DIM = EMBED_DIM // NUM_HEADS
TGT_LEN = 8
SRC_LEN = 8
BSZ = 2
REL_PAD_IDX = 0     # vocabs['rel'].pad_idx
REL_NIL_IDX = 3     # vocabs['rel'].get_idx(NIL)
LN_EPS = 1e-5
NEG_INF = -1e30
SCALING = HEAD_DIM ** -0.5

# ---- packed-parameter layout (single VMEM input; see _pack_params) -------------
PACK_COLS = 3 * EMBED_DIM                 # 96 lanes (>= FF_DIM)
R_WQKV = 0                                # [E, 3E]  fused q/k/v weight (q pre-scaled)
R_WO = R_WQKV + EMBED_DIM                 # [E, E]
R_W1 = R_WO + EMBED_DIM                   # [E, FF]
R_W2 = R_W1 + EMBED_DIM                   # [FF, E]
R_HM = R_W2 + FF_DIM                      # [H*T, E] block head mask (0/1)
R_VEC = R_HM + NUM_HEADS * TGT_LEN        # 8 rows: bqkv, bo, ln1g, ln1b, b1, b2, ln2g, ln2b
PACK_ROWS = R_VEC + 8                     # = 200


def _layer_norm(x, gamma, beta):
    mean = jnp.mean(x, axis=-1, keepdims=True)
    var = jnp.mean(jnp.square(x - mean), axis=-1, keepdims=True)
    return (x - mean) * lax.rsqrt(var + LN_EPS) * gamma + beta


def _bce_masked(arc_w, rel):
    """PyTorch F.binary_cross_entropy (log clamped at -100), zeroed where rel == PAD."""
    target = (rel != REL_NIL_IDX).astype(jnp.float32)
    pad_mask = rel == REL_PAD_IDX
    logp = jnp.maximum(jnp.log(arc_w), -100.0)
    log1mp = jnp.maximum(jnp.log(1.0 - arc_w), -100.0)
    bce = -(target * logp + (1.0 - target) * log1mp)
    return jnp.where(pad_mask, 0.0, bce)


# ----------------------------- Pallas kernel -----------------------------------
def joint_arc_kernel(x_ref, bias_ref, rel_ref, pp, y_ref, loss_ref):
    """Grid-less single-shot kernel (everything fits trivially in VMEM).

      x_ref    [B*(T+S), E]  rows 0:B*T = outs (batch-major), rows B*T: = graph_state
      bias_ref [B, H*T, S]   additive attention mask (-1e30 where masked), tiled per head
      rel_ref  [B, T, S]     int32 target relation ids
      pp       [PACK_ROWS, PACK_COLS] packed parameters + head mask (one DMA, not 16)
      y_ref    [B*T, E]      transformer-layer output (batch-major rows)
      loss_ref [1, B]        per-batch arc BCE loss
    """
    B, T, S, E, FF, H = BSZ, TGT_LEN, SRC_LEN, EMBED_DIM, FF_DIM, NUM_HEADS
    BT = B * T

    # ---- fused q/k/v projection: one [B*(T+S), E] x [E, 3E] matmul ----------------
    wqkv = pp[R_WQKV:R_WQKV + E, :]                         # [E, 3E]  (q block pre-scaled)
    bqkv = pp[R_VEC + 0:R_VEC + 1, :]                       # [1, 3E]
    qkv = jnp.dot(x_ref[...], wqkv, preferred_element_type=jnp.float32) + bqkv

    q = qkv[0:BT, 0:E].reshape(B, T, E)                     # scaling already folded in
    k = qkv[BT:, E:2 * E].reshape(B, S, E)
    v = qkv[BT:, 2 * E:3 * E].reshape(B, S, E)

    # ---- all (batch, head) attention with two batched matmuls --------------------
    # Heads live on the sublane-major row axis (row m = h*T + t); the 0/1 block head
    # mask zeroes the lanes outside head h, so no 8-lane slicing / lane concat occurs.
    hm = pp[R_HM:R_HM + H * T, 0:E]                         # [H*T, E]
    q_rep = jnp.concatenate([q] * H, axis=1) * hm[None, :, :]            # [B, H*T, E]
    logits = jnp.einsum('bme,bse->bms', q_rep, k,
                        preferred_element_type=jnp.float32)              # [B, H*T, S]
    logits = logits + bias_ref[...]                         # additive mask (precomputed)
    mx = jnp.max(logits, axis=-1, keepdims=True)
    ex = jnp.exp(logits - mx)
    p = ex / jnp.sum(ex, axis=-1, keepdims=True)            # softmax     [B, H*T, S]

    # context against full V, keep head-h lanes, fold heads with tile-aligned adds
    ctx = jnp.einsum('bms,bse->bme', p, v,
                     preferred_element_type=jnp.float32) * hm[None, :, :]
    u = ctx[:, 0:T, :]
    for h in range(1, H):
        u = u + ctx[:, h * T:(h + 1) * T, :]                # [B, T, E] multi-head context

    wo = pp[R_WO:R_WO + E, 0:E]
    bo = pp[R_VEC + 1:R_VEC + 2, 0:E]
    attn = jnp.dot(u.reshape(BT, E), wo, preferred_element_type=jnp.float32) + bo

    # ---- residual + LN + FFN + LN over all B*T rows at once ----------------------
    ln1g = pp[R_VEC + 2:R_VEC + 3, 0:E]
    ln1b = pp[R_VEC + 3:R_VEC + 4, 0:E]
    b1 = pp[R_VEC + 4:R_VEC + 5, 0:FF]
    b2 = pp[R_VEC + 5:R_VEC + 6, 0:E]
    ln2g = pp[R_VEC + 6:R_VEC + 7, 0:E]
    ln2b = pp[R_VEC + 7:R_VEC + 8, 0:E]
    w1 = pp[R_W1:R_W1 + E, 0:FF]
    w2 = pp[R_W2:R_W2 + FF, 0:E]

    x1 = _layer_norm(x_ref[0:BT, :] + attn, ln1g, ln1b)     # dropout = identity (eval)
    hid = jnp.maximum(jnp.dot(x1, w1, preferred_element_type=jnp.float32) + b1, 0.0)
    ff = jnp.dot(hid, w2, preferred_element_type=jnp.float32) + b2
    y_ref[...] = _layer_norm(x1 + ff, ln2g, ln2b)

    # ---- arc BCE loss: arc_w = max over heads of attention probs -----------------
    arc_w = p[:, 0:T, :]
    for h in range(1, H):
        arc_w = jnp.maximum(arc_w, p[:, h * T:(h + 1) * T, :])           # [B, T, S]
    bce = _bce_masked(arc_w, rel_ref[...])                               # [B, T, S]
    cols = []
    for b in range(B):
        cols.append(jnp.sum(jnp.sum(bce[b], axis=1, keepdims=True),
                            axis=0, keepdims=True))                      # [1, 1]
    loss_ref[...] = jnp.concatenate(cols, axis=1)                        # [1, B]


# ------------------------------- wrapper ----------------------------------------
def _pack_params(p):
    """Fold SCALING into wq/bq, fuse q/k/v, and pack all params plus the constant
    block head mask into a single [PACK_ROWS, PACK_COLS] f32 array (1 DMA, not 16+)."""
    def pad_c(a):
        return jnp.pad(a, ((0, 0), (0, PACK_COLS - a.shape[1])))

    wqkv = jnp.concatenate([p['wq'] * SCALING, p['wk'], p['wv']], axis=1)   # [E, 3E]
    bqkv = jnp.concatenate([p['bq'] * SCALING, p['bk'], p['bv']], axis=1)   # [1, 3E]
    head_mask = (jnp.arange(EMBED_DIM)[None, :] // HEAD_DIM
                 == jnp.arange(NUM_HEADS)[:, None]).astype(jnp.float32)     # [H, E]
    hm_rows = jnp.repeat(head_mask, TGT_LEN, axis=0)                        # [H*T, E]
    rows = [wqkv, pad_c(p['wo']), pad_c(p['w1']), pad_c(p['w2']), pad_c(hm_rows),
            bqkv, pad_c(p['bo']), pad_c(p['ln1g']), pad_c(p['ln1b']),
            pad_c(p['b1']), pad_c(p['b2']), pad_c(p['ln2g']), pad_c(p['ln2b'])]
    packed = jnp.concatenate(rows, axis=0).astype(jnp.float32)
    assert packed.shape == (PACK_ROWS, PACK_COLS)
    return packed


def arc_generator_forward(params, outs, graph_state, graph_padding_mask, attn_mask, target_rel):
    """Eval-mode, work=False forward. Returns (arc_loss [B], outs [T, B, E])."""
    # additive attention-mask bias, tiled per head: [B, H*T, S]  (row m = h*T + t)
    comb = jnp.logical_or(attn_mask[None, :, :],                           # [1, T, S]
                          jnp.transpose(graph_padding_mask)[:, None, :])   # [B, 1, S]
    bias = jnp.where(comb, NEG_INF, 0.0).astype(jnp.float32)               # [B, T, S]
    bias = jnp.tile(bias[:, None, :, :], (1, NUM_HEADS, 1, 1)).reshape(
        BSZ, NUM_HEADS * TGT_LEN, SRC_LEN)

    # batch-major 2-D activations, outs rows stacked above graph rows (fused QKV)
    outs_2d = jnp.transpose(outs, (1, 0, 2)).reshape(BSZ * TGT_LEN, EMBED_DIM)
    graph_2d = jnp.transpose(graph_state, (1, 0, 2)).reshape(BSZ * SRC_LEN, EMBED_DIM)
    xcat = jnp.concatenate([outs_2d, graph_2d], axis=0).astype(jnp.float32)
    rel_b = jnp.transpose(target_rel, (1, 0, 2)).astype(jnp.int32)         # [B, T, S]

    packed = _pack_params(params)

    vmem = pl.BlockSpec(memory_space=pltpu.MemorySpace.VMEM)
    y2, loss = pl.pallas_call(
        joint_arc_kernel,
        out_shape=(jax.ShapeDtypeStruct((BSZ * TGT_LEN, EMBED_DIM), jnp.float32),
                   jax.ShapeDtypeStruct((1, BSZ), jnp.float32)),
        in_specs=[vmem, vmem, vmem, vmem],
        out_specs=(vmem, vmem),
    )(xcat, bias, rel_b, packed)

    y = jnp.transpose(y2.reshape(BSZ, TGT_LEN, EMBED_DIM), (1, 0, 2))      # [T, B, E]
    return loss[0], y


# -------------------------- pure-JAX reference ----------------------------------
def arc_generator_reference(params, outs, graph_state, graph_padding_mask, attn_mask, target_rel):
    T, B, E = outs.shape
    S = graph_state.shape[0]
    hp = dict(precision=lax.Precision.HIGHEST)
    q = (jnp.einsum('tbe,ef->tbf', outs, params['wq'], **hp) + params['bq'][0]) * SCALING
    k = jnp.einsum('sbe,ef->sbf', graph_state, params['wk'], **hp) + params['bk'][0]
    v = jnp.einsum('sbe,ef->sbf', graph_state, params['wv'], **hp) + params['bv'][0]
    qh = q.reshape(T, B, NUM_HEADS, HEAD_DIM)
    kh = k.reshape(S, B, NUM_HEADS, HEAD_DIM)
    vh = v.reshape(S, B, NUM_HEADS, HEAD_DIM)
    logits = jnp.einsum('tbhd,sbhd->bhts', qh, kh, **hp)
    mask = jnp.logical_or(attn_mask[None, None, :, :],
                          jnp.transpose(graph_padding_mask)[:, None, None, :])
    logits = jnp.where(mask, NEG_INF, logits)
    p = jax.nn.softmax(logits, axis=-1)                               # [B, H, T, S]
    attn = jnp.einsum('bhts,sbhd->tbhd', p, vh, **hp).reshape(T, B, E)
    attn = jnp.einsum('tbe,ef->tbf', attn, params['wo'], **hp) + params['bo'][0]
    x = _layer_norm(outs + attn, params['ln1g'][0], params['ln1b'][0])
    residual = x
    hid = jax.nn.relu(jnp.einsum('tbe,ef->tbf', x, params['w1'], **hp) + params['b1'][0])
    ff = jnp.einsum('tbf,fe->tbe', hid, params['w2'], **hp) + params['b2'][0]
    y = _layer_norm(residual + ff, params['ln2g'][0], params['ln2b'][0])
    arc_w = jnp.transpose(jnp.max(p, axis=1), (1, 0, 2))              # [T, B, S]
    loss = _bce_masked(arc_w, target_rel).sum(axis=(0, 2))
    return loss, y


# ------------------------------ init & main --------------------------------------
def init_params(key):
    ks = jax.random.split(key, 10)

    def lin(k, fi, fo):
        kw, kb = jax.random.split(k)
        w = jax.random.normal(kw, (fi, fo), jnp.float32) / jnp.sqrt(float(fi))
        b = 0.02 * jax.random.normal(kb, (1, fo), jnp.float32)
        return w, b

    wq, bq = lin(ks[0], EMBED_DIM, EMBED_DIM)
    wk, bk = lin(ks[1], EMBED_DIM, EMBED_DIM)
    wv, bv = lin(ks[2], EMBED_DIM, EMBED_DIM)
    wo, bo = lin(ks[3], EMBED_DIM, EMBED_DIM)
    w1, b1 = lin(ks[4], EMBED_DIM, FF_DIM)
    w2, b2 = lin(ks[5], FF_DIM, EMBED_DIM)
    ln1g = 1.0 + 0.05 * jax.random.normal(ks[6], (1, EMBED_DIM), jnp.float32)
    ln1b = 0.05 * jax.random.normal(ks[7], (1, EMBED_DIM), jnp.float32)
    ln2g = 1.0 + 0.05 * jax.random.normal(ks[8], (1, EMBED_DIM), jnp.float32)
    ln2b = 0.05 * jax.random.normal(ks[9], (1, EMBED_DIM), jnp.float32)
    return dict(wq=wq, bq=bq, wk=wk, bk=bk, wv=wv, bv=bv, wo=wo, bo=bo,
                ln1g=ln1g, ln1b=ln1b, w1=w1, b1=b1, w2=w2, b2=b2,
                ln2g=ln2g, ln2b=ln2b)


if __name__ == "__main__":
    key = jax.random.PRNGKey(0)
    kp, k1, k2, k3 = jax.random.split(key, 4)
    params = init_params(kp)

    outs = jax.random.normal(k1, (TGT_LEN, BSZ, EMBED_DIM), jnp.float32)
    graph_state = jax.random.normal(k2, (SRC_LEN, BSZ, EMBED_DIM), jnp.float32)
    # batch 1 has its last two graph positions padded
    graph_padding_mask = jnp.zeros((SRC_LEN, BSZ), jnp.bool_).at[SRC_LEN - 2:, 1].set(True)
    # band-style attn mask that leaves every query row with at least one valid key
    t_idx = jnp.arange(TGT_LEN)[:, None]
    s_idx = jnp.arange(SRC_LEN)[None, :]
    attn_mask = s_idx > (t_idx + 3)
    target_rel = jax.random.randint(k3, (TGT_LEN, BSZ, SRC_LEN), 0, 8, dtype=jnp.int32)

    fwd = jax.jit(lambda *a: arc_generator_forward(params, *a))
    arc_loss, outs_out = fwd(outs, graph_state, graph_padding_mask, attn_mask, target_rel)
    jax.block_until_ready((arc_loss, outs_out))

    ref_loss, ref_outs = arc_generator_reference(params, outs, graph_state,
                                                 graph_padding_mask, attn_mask, target_rel)
    np.testing.assert_allclose(np.asarray(outs_out), np.asarray(ref_outs), rtol=1e-2, atol=1e-2)
    np.testing.assert_allclose(np.asarray(arc_loss), np.asarray(ref_loss), rtol=1e-2, atol=1e-1)

    print("KERNEL_OK")
</pallas_src>

<mosaic_0001>
module attributes {stable_mosaic.version = 11 : i64} {
  func.func @joint_arc_kernel(%arg0: memref<32x32xf32, #tpu.memory_space<vmem>>, %arg1: memref<2x32x8xf32, #tpu.memory_space<vmem>>, %arg2: memref<2x8x8xi32, #tpu.memory_space<vmem>>, %arg3: memref<200x96xf32, #tpu.memory_space<vmem>>, %arg4: memref<16x32xf32, #tpu.memory_space<vmem>>, %arg5: memref<1x2xf32, #tpu.memory_space<vmem>>) attributes {dimension_semantics = [], scalar_prefetch = 0 : i64, scratch_operands = 0 : i64, tpu.core_type = #tpu.core_type<tc>} {
    %c0 = arith.constant 0 : index
    %c0_0 = arith.constant 0 : index
    %0 = vector.load %arg3[%c0, %c0_0] : memref<200x96xf32, #tpu.memory_space<vmem>>, vector<32x96xf32>
    %c192 = arith.constant 192 : index
    %c0_1 = arith.constant 0 : index
    %1 = vector.load %arg3[%c192, %c0_1] : memref<200x96xf32, #tpu.memory_space<vmem>>, vector<1x96xf32>
    %c0_2 = arith.constant 0 : index
    %c0_3 = arith.constant 0 : index
    %2 = vector.load %arg0[%c0_2, %c0_3] : memref<32x32xf32, #tpu.memory_space<vmem>>, vector<32x32xf32>
    %cst = arith.constant dense<0.000000e+00> : vector<32x96xf32>
    %3 = tpu.matmul %2, %0, %cst {dimension_numbers = #tpu.dot_dimension_numbers<[1], [0], [0], [1], [0, 0, 1, 1], [], []>} : vector<32x32xf32>, vector<32x96xf32>, vector<32x96xf32> -> vector<32x96xf32>
    %4 = vector.broadcast %1 : vector<1x96xf32> to vector<32x96xf32>
    %5 = arith.addf %3, %4 : vector<32x96xf32>
    %6 = vector.extract_strided_slice %5 {offsets = [0, 0], sizes = [16, 32], strides = [1, 1]} : vector<32x96xf32> to vector<16x32xf32>
    %7 = vector.shape_cast %6 : vector<16x32xf32> to vector<2x8x32xf32>
    %8 = vector.extract_strided_slice %5 {offsets = [16, 32], sizes = [16, 32], strides = [1, 1]} : vector<32x96xf32> to vector<16x32xf32>
    %9 = vector.shape_cast %8 : vector<16x32xf32> to vector<2x8x32xf32>
    %10 = vector.extract_strided_slice %5 {offsets = [16, 64], sizes = [16, 32], strides = [1, 1]} : vector<32x96xf32> to vector<16x32xf32>
    %11 = vector.shape_cast %10 : vector<16x32xf32> to vector<2x8x32xf32>
    %c160 = arith.constant 160 : index
    %c0_4 = arith.constant 0 : index
    %12 = vector.load %arg3[%c160, %c0_4] : memref<200x96xf32, #tpu.memory_space<vmem>>, vector<32x32xf32>
    %13 = tpu.concatenate %7, %7, %7, %7 in 1 : vector<2x8x32xf32>, vector<2x8x32xf32>, vector<2x8x32xf32>, vector<2x8x32xf32> -> vector<2x32x32xf32>
    %14 = vector.shape_cast %12 : vector<32x32xf32> to vector<1x32x32xf32>
    %15 = vector.broadcast %14 : vector<1x32x32xf32> to vector<2x32x32xf32>
    %16 = arith.mulf %13, %15 : vector<2x32x32xf32>
    "tpu.trace_start"() <{level = 10 : i32, message = "bme,bse->bms"}> : () -> ()
    %cst_5 = arith.constant dense<0.000000e+00> : vector<2x32x8xf32>
    %17 = tpu.matmul %16, %9, %cst_5 {dimension_numbers = #tpu.dot_dimension_numbers<[2], [2], [1], [1], [0, 0, 0, 1, 1, 1], [0], [0]>} : vector<2x32x32xf32>, vector<2x8x32xf32>, vector<2x32x8xf32> -> vector<2x32x8xf32>
    "tpu.trace_stop"() : () -> ()
    %c0_6 = arith.constant 0 : index
    %c0_7 = arith.constant 0 : index
    %c0_8 = arith.constant 0 : index
    %18 = vector.load %arg1[%c0_6, %c0_7, %c0_8] : memref<2x32x8xf32, #tpu.memory_space<vmem>>, vector<2x32x8xf32>
    %19 = arith.addf %17, %18 : vector<2x32x8xf32>
    %cst_9 = arith.constant dense<0xFF800000> : vector<2x32xf32>
    %20 = vector.multi_reduction <maximumf>, %19, %cst_9 [2] : vector<2x32x8xf32> to vector<2x32xf32>
    %21 = vector.shape_cast %20 : vector<2x32xf32> to vector<2x32x1xf32>
    %22 = vector.broadcast %21 : vector<2x32x1xf32> to vector<2x32x8xf32>
    %23 = arith.subf %19, %22 : vector<2x32x8xf32>
    %24 = math.exp %23 : vector<2x32x8xf32>
    %cst_10 = arith.constant dense<0.000000e+00> : vector<2x32xf32>
    %25 = vector.multi_reduction <add>, %24, %cst_10 [2] : vector<2x32x8xf32> to vector<2x32xf32>
    %26 = vector.shape_cast %25 : vector<2x32xf32> to vector<2x32x1xf32>
    %27 = vector.broadcast %26 : vector<2x32x1xf32> to vector<2x32x8xf32>
    %28 = arith.divf %24, %27 : vector<2x32x8xf32>
    "tpu.trace_start"() <{level = 10 : i32, message = "bms,bse->bme"}> : () -> ()
    %cst_11 = arith.constant dense<0.000000e+00> : vector<2x32x32xf32>
    %29 = tpu.matmul %28, %11, %cst_11 {dimension_numbers = #tpu.dot_dimension_numbers<[2], [1], [1], [2], [0, 0, 0, 1, 1, 2], [0], [0]>} : vector<2x32x8xf32>, vector<2x8x32xf32>, vector<2x32x32xf32> -> vector<2x32x32xf32>
    "tpu.trace_stop"() : () -> ()
    %30 = vector.shape_cast %12 : vector<32x32xf32> to vector<1x32x32xf32>
    %31 = vector.broadcast %30 : vector<1x32x32xf32> to vector<2x32x32xf32>
    %32 = arith.mulf %29, %31 : vector<2x32x32xf32>
    %33 = vector.extract_strided_slice %32 {offsets = [0, 0, 0], sizes = [2, 8, 32], strides = [1, 1, 1]} : vector<2x32x32xf32> to vector<2x8x32xf32>
    %34 = vector.extract_strided_slice %32 {offsets = [0, 8, 0], sizes = [2, 8, 32], strides = [1, 1, 1]} : vector<2x32x32xf32> to vector<2x8x32xf32>
    %35 = arith.addf %33, %34 : vector<2x8x32xf32>
    %36 = vector.extract_strided_slice %32 {offsets = [0, 16, 0], sizes = [2, 8, 32], strides = [1, 1, 1]} : vector<2x32x32xf32> to vector<2x8x32xf32>
    %37 = arith.addf %35, %36 : vector<2x8x32xf32>
    %38 = vector.extract_strided_slice %32 {offsets = [0, 24, 0], sizes = [2, 8, 32], strides = [1, 1, 1]} : vector<2x32x32xf32> to vector<2x8x32xf32>
    %39 = arith.addf %37, %38 : vector<2x8x32xf32>
    %c32 = arith.constant 32 : index
    %c0_12 = arith.constant 0 : index
    %40 = vector.load %arg3[%c32, %c0_12] : memref<200x96xf32, #tpu.memory_space<vmem>>, vector<32x32xf32>
    %c193 = arith.constant 193 : index
    %c0_13 = arith.constant 0 : index
    %41 = vector.load %arg3[%c193, %c0_13] : memref<200x96xf32, #tpu.memory_space<vmem>>, vector<1x32xf32>
    %42 = vector.shape_cast %39 : vector<2x8x32xf32> to vector<16x32xf32>
    %cst_14 = arith.constant dense<0.000000e+00> : vector<16x32xf32>
    %43 = tpu.matmul %42, %40, %cst_14 {dimension_numbers = #tpu.dot_dimension_numbers<[1], [0], [0], [1], [0, 0, 1, 1], [], []>} : vector<16x32xf32>, vector<32x32xf32>, vector<16x32xf32> -> vector<16x32xf32>
    %44 = vector.broadcast %41 : vector<1x32xf32> to vector<16x32xf32>
    %45 = arith.addf %43, %44 : vector<16x32xf32>
    %c194 = arith.constant 194 : index
    %c0_15 = arith.constant 0 : index
    %46 = vector.load %arg3[%c194, %c0_15] : memref<200x96xf32, #tpu.memory_space<vmem>>, vector<1x32xf32>
    %c195 = arith.constant 195 : index
    %c0_16 = arith.constant 0 : index
    %47 = vector.load %arg3[%c195, %c0_16] : memref<200x96xf32, #tpu.memory_space<vmem>>, vector<1x32xf32>
    %c196 = arith.constant 196 : index
    %c0_17 = arith.constant 0 : index
    %48 = vector.load %arg3[%c196, %c0_17] : memref<200x96xf32, #tpu.memory_space<vmem>>, vector<1x64xf32>
    %c197 = arith.constant 197 : index
    %c0_18 = arith.constant 0 : index
    %49 = vector.load %arg3[%c197, %c0_18] : memref<200x96xf32, #tpu.memory_space<vmem>>, vector<1x32xf32>
    %c198 = arith.constant 198 : index
    %c0_19 = arith.constant 0 : index
    %50 = vector.load %arg3[%c198, %c0_19] : memref<200x96xf32, #tpu.memory_space<vmem>>, vector<1x32xf32>
    %c199 = arith.constant 199 : index
    %c0_20 = arith.constant 0 : index
    %51 = vector.load %arg3[%c199, %c0_20] : memref<200x96xf32, #tpu.memory_space<vmem>>, vector<1x32xf32>
    %c64 = arith.constant 64 : index
    %c0_21 = arith.constant 0 : index
    %52 = vector.load %arg3[%c64, %c0_21] : memref<200x96xf32, #tpu.memory_space<vmem>>, vector<32x64xf32>
    %c96 = arith.constant 96 : index
    %c0_22 = arith.constant 0 : index
    %53 = vector.load %arg3[%c96, %c0_22] : memref<200x96xf32, #tpu.memory_space<vmem>>, vector<64x32xf32>
    %c0_23 = arith.constant 0 : index
    %c0_24 = arith.constant 0 : index
    %54 = vector.load %arg0[%c0_23, %c0_24] : memref<32x32xf32, #tpu.memory_space<vmem>>, vector<16x32xf32>
    %55 = arith.addf %54, %45 : vector<16x32xf32>
    %cst_25 = arith.constant dense<0.000000e+00> : vector<16xf32>
    %56 = vector.multi_reduction <add>, %55, %cst_25 [1] : vector<16x32xf32> to vector<16xf32>
    %57 = vector.shape_cast %56 : vector<16xf32> to vector<16x1xf32>
    %cst_26 = arith.constant 3.200000e+01 : f32
    %58 = vector.broadcast %cst_26 : f32 to vector<16x1xf32>
    %59 = arith.divf %57, %58 : vector<16x1xf32>
    %60 = vector.broadcast %59 : vector<16x1xf32> to vector<16x32xf32>
    %61 = arith.subf %55, %60 : vector<16x32xf32>
    %62 = arith.mulf %61, %61 : vector<16x32xf32>
    %cst_27 = arith.constant dense<0.000000e+00> : vector<16xf32>
    %63 = vector.multi_reduction <add>, %62, %cst_27 [1] : vector<16x32xf32> to vector<16xf32>
    %64 = vector.shape_cast %63 : vector<16xf32> to vector<16x1xf32>
    %cst_28 = arith.constant 3.200000e+01 : f32
    %65 = vector.broadcast %cst_28 : f32 to vector<16x1xf32>
    %66 = arith.divf %64, %65 : vector<16x1xf32>
    %67 = vector.broadcast %59 : vector<16x1xf32> to vector<16x32xf32>
    %68 = arith.subf %55, %67 : vector<16x32xf32>
    %cst_29 = arith.constant 9.99999974E-6 : f32
    %69 = vector.broadcast %cst_29 : f32 to vector<16x1xf32>
    %70 = arith.addf %66, %69 : vector<16x1xf32>
    %71 = math.rsqrt %70 : vector<16x1xf32>
    %72 = vector.broadcast %71 : vector<16x1xf32> to vector<16x32xf32>
    %73 = arith.mulf %68, %72 : vector<16x32xf32>
    %74 = vector.broadcast %46 : vector<1x32xf32> to vector<16x32xf32>
    %75 = arith.mulf %73, %74 : vector<16x32xf32>
    %76 = vector.broadcast %47 : vector<1x32xf32> to vector<16x32xf32>
    %77 = arith.addf %75, %76 : vector<16x32xf32>
    %cst_30 = arith.constant dense<0.000000e+00> : vector<16x64xf32>
    %78 = tpu.matmul %77, %52, %cst_30 {dimension_numbers = #tpu.dot_dimension_numbers<[1], [0], [0], [1], [0, 0, 1, 1], [], []>} : vector<16x32xf32>, vector<32x64xf32>, vector<16x64xf32> -> vector<16x64xf32>
    %79 = vector.broadcast %48 : vector<1x64xf32> to vector<16x64xf32>
    %80 = arith.addf %78, %79 : vector<16x64xf32>
    %cst_31 = arith.constant 0.000000e+00 : f32
    %81 = vector.broadcast %cst_31 : f32 to vector<16x64xf32>
    %82 = arith.maximumf %80, %81 : vector<16x64xf32>
    %cst_32 = arith.constant dense<0.000000e+00> : vector<16x32xf32>
    %83 = tpu.matmul %82, %53, %cst_32 {dimension_numbers = #tpu.dot_dimension_numbers<[1], [0], [0], [1], [0, 0, 1, 1], [], []>} : vector<16x64xf32>, vector<64x32xf32>, vector<16x32xf32> -> vector<16x32xf32>
    %84 = vector.broadcast %49 : vector<1x32xf32> to vector<16x32xf32>
    %85 = arith.addf %83, %84 : vector<16x32xf32>
    %86 = arith.addf %77, %85 : vector<16x32xf32>
    %cst_33 = arith.constant dense<0.000000e+00> : vector<16xf32>
    %87 = vector.multi_reduction <add>, %86, %cst_33 [1] : vector<16x32xf32> to vector<16xf32>
    %88 = vector.shape_cast %87 : vector<16xf32> to vector<16x1xf32>
    %cst_34 = arith.constant 3.200000e+01 : f32
    %89 = vector.broadcast %cst_34 : f32 to vector<16x1xf32>
    %90 = arith.divf %88, %89 : vector<16x1xf32>
    %91 = vector.broadcast %90 : vector<16x1xf32> to vector<16x32xf32>
    %92 = arith.subf %86, %91 : vector<16x32xf32>
    %93 = arith.mulf %92, %92 : vector<16x32xf32>
    %cst_35 = arith.constant dense<0.000000e+00> : vector<16xf32>
    %94 = vector.multi_reduction <add>, %93, %cst_35 [1] : vector<16x32xf32> to vector<16xf32>
    %95 = vector.shape_cast %94 : vector<16xf32> to vector<16x1xf32>
    %cst_36 = arith.constant 3.200000e+01 : f32
    %96 = vector.broadcast %cst_36 : f32 to vector<16x1xf32>
    %97 = arith.divf %95, %96 : vector<16x1xf32>
    %98 = vector.broadcast %90 : vector<16x1xf32> to vector<16x32xf32>
    %99 = arith.subf %86, %98 : vector<16x32xf32>
    %cst_37 = arith.constant 9.99999974E-6 : f32
    %100 = vector.broadcast %cst_37 : f32 to vector<16x1xf32>
    %101 = arith.addf %97, %100 : vector<16x1xf32>
    %102 = math.rsqrt %101 : vector<16x1xf32>
    %103 = vector.broadcast %102 : vector<16x1xf32> to vector<16x32xf32>
    %104 = arith.mulf %99, %103 : vector<16x32xf32>
    %105 = vector.broadcast %50 : vector<1x32xf32> to vector<16x32xf32>
    %106 = arith.mulf %104, %105 : vector<16x32xf32>
    %107 = vector.broadcast %51 : vector<1x32xf32> to vector<16x32xf32>
    %108 = arith.addf %106, %107 : vector<16x32xf32>
    %c0_38 = arith.constant 0 : index
    %c0_39 = arith.constant 0 : index
    %109 = vector.load %arg4[%c0_38, %c0_39] : memref<16x32xf32, #tpu.memory_space<vmem>>, vector<16x32xf32>
    tpu.vector_store %arg4[%c0_38, %c0_39], %108 {strides = array<i32>} : memref<16x32xf32, #tpu.memory_space<vmem>>, vector<16x32xf32>,
    %110 = vector.extract_strided_slice %28 {offsets = [0, 0, 0], sizes = [2, 8, 8], strides = [1, 1, 1]} : vector<2x32x8xf32> to vector<2x8x8xf32>
    %111 = vector.extract_strided_slice %28 {offsets = [0, 8, 0], sizes = [2, 8, 8], strides = [1, 1, 1]} : vector<2x32x8xf32> to vector<2x8x8xf32>
    %112 = arith.maximumf %110, %111 : vector<2x8x8xf32>
    %113 = vector.extract_strided_slice %28 {offsets = [0, 16, 0], sizes = [2, 8, 8], strides = [1, 1, 1]} : vector<2x32x8xf32> to vector<2x8x8xf32>
    %114 = arith.maximumf %112, %113 : vector<2x8x8xf32>
    %115 = vector.extract_strided_slice %28 {offsets = [0, 24, 0], sizes = [2, 8, 8], strides = [1, 1, 1]} : vector<2x32x8xf32> to vector<2x8x8xf32>
    %116 = arith.maximumf %114, %115 : vector<2x8x8xf32>
    %c0_40 = arith.constant 0 : index
    %c0_41 = arith.constant 0 : index
    %c0_42 = arith.constant 0 : index
    %117 = vector.load %arg2[%c0_40, %c0_41, %c0_42] : memref<2x8x8xi32, #tpu.memory_space<vmem>>, vector<2x8x8xi32>
    %c3_i32 = arith.constant 3 : i32
    %118 = vector.broadcast %c3_i32 : i32 to vector<2x8x8xi32>
    %119 = arith.cmpi ne, %117, %118 : vector<2x8x8xi32>
    %120 = arith.extui %119 : vector<2x8x8xi1> to vector<2x8x8xi32>
    %121 = arith.sitofp %120 : vector<2x8x8xi32> to vector<2x8x8xf32>
    %c0_i32 = arith.constant 0 : i32
    %122 = vector.broadcast %c0_i32 : i32 to vector<2x8x8xi32>
    %123 = arith.cmpi eq, %117, %122 : vector<2x8x8xi32>
    %124 = math.log %116 : vector<2x8x8xf32>
    %cst_43 = arith.constant -1.000000e+02 : f32
    %125 = vector.broadcast %cst_43 : f32 to vector<2x8x8xf32>
    %126 = arith.maximumf %124, %125 : vector<2x8x8xf32>
    %cst_44 = arith.constant 1.000000e+00 : f32
    %127 = vector.broadcast %cst_44 : f32 to vector<2x8x8xf32>
    %128 = arith.subf %127, %116 : vector<2x8x8xf32>
    %129 = math.log %128 : vector<2x8x8xf32>
    %cst_45 = arith.constant -1.000000e+02 : f32
    %130 = vector.broadcast %cst_45 : f32 to vector<2x8x8xf32>
    %131 = arith.maximumf %129, %130 : vector<2x8x8xf32>
    %132 = arith.mulf %121, %126 : vector<2x8x8xf32>
    %cst_46 = arith.constant 1.000000e+00 : f32
    %133 = vector.broadcast %cst_46 : f32 to vector<2x8x8xf32>
    %134 = arith.subf %133, %121 : vector<2x8x8xf32>
    %135 = arith.mulf %134, %131 : vector<2x8x8xf32>
    %136 = arith.addf %132, %135 : vector<2x8x8xf32>
    %cst_47 = arith.constant 0.000000e+00 : f32
    %137 = vector.broadcast %cst_47 : f32 to vector<2x8x8xf32>
    %138 = arith.subf %137, %136 : vector<2x8x8xf32>
    %cst_48 = arith.constant 0.000000e+00 : f32
    %139 = vector.broadcast %cst_48 : f32 to vector<2x8x8xf32>
    %140 = arith.select %123, %139, %138 : vector<2x8x8xi1>, vector<2x8x8xf32>
    %141 = vector.extract_strided_slice %140 {offsets = [0, 0, 0], sizes = [1, 8, 8], strides = [1, 1, 1]} : vector<2x8x8xf32> to vector<1x8x8xf32>
    %142 = vector.shape_cast %141 : vector<1x8x8xf32> to vector<8x8xf32>
    %cst_49 = arith.constant dense<0.000000e+00> : vector<8xf32>
    %143 = vector.multi_reduction <add>, %142, %cst_49 [1] : vector<8x8xf32> to vector<8xf32>
    %144 = vector.shape_cast %143 : vector<8xf32> to vector<8x1xf32>
    %cst_50 = arith.constant dense<0.000000e+00> : vector<1xf32>
    %145 = vector.multi_reduction <add>, %144, %cst_50 [0] : vector<8x1xf32> to vector<1xf32>
    %146 = vector.shape_cast %145 : vector<1xf32> to vector<1x1xf32>
    %147 = vector.extract_strided_slice %140 {offsets = [1, 0, 0], sizes = [1, 8, 8], strides = [1, 1, 1]} : vector<2x8x8xf32> to vector<1x8x8xf32>
    %148 = vector.shape_cast %147 : vector<1x8x8xf32> to vector<8x8xf32>
    %cst_51 = arith.constant dense<0.000000e+00> : vector<8xf32>
    %149 = vector.multi_reduction <add>, %148, %cst_51 [1] : vector<8x8xf32> to vector<8xf32>
    %150 = vector.shape_cast %149 : vector<8xf32> to vector<8x1xf32>
    %cst_52 = arith.constant dense<0.000000e+00> : vector<1xf32>
    %151 = vector.multi_reduction <add>, %150, %cst_52 [0] : vector<8x1xf32> to vector<1xf32>
    %152 = vector.shape_cast %151 : vector<1xf32> to vector<1x1xf32>
    %153 = tpu.concatenate %146, %152 in 1 : vector<1x1xf32>, vector<1x1xf32> -> vector<1x2xf32>
    %c0_53 = arith.constant 0 : index
    %c0_54 = arith.constant 0 : index
    %154 = vector.load %arg5[%c0_53, %c0_54] : memref<1x2xf32, #tpu.memory_space<vmem>>, vector<1x2xf32>
    tpu.vector_store %arg5[%c0_53, %c0_54], %153 {strides = array<i32>} : memref<1x2xf32, #tpu.memory_space<vmem>>, vector<1x2xf32>,
    return
  }
}

</mosaic_0001>

<llo_original>
// kernel: _lambda_.1
$region0: #{_lambda_.1}
  #allocation0 [shape = 'u32[]', space=smem, size = 0x4, offset = 0x4, fixed_abs, tag = 'smem constant byte address 0x4 - core index']
  #allocation1 [shape = 'u32[144,128]{1,0:T(1,128)}', space=vmem, size = 0x12000, scoped, tag = 'internal scratch']
  %s0 = inlined_call_operand.vmem [shape: f32[32,32], index: 0, kind: input, shape index: {}]
  %s1 = inlined_call_operand.vmem [shape: f32[2,32,8], index: 1, kind: input, shape index: {}]
  %s2 = inlined_call_operand.vmem [shape: s32[2,8,8], index: 2, kind: input, shape index: {}]
  %s3 = inlined_call_operand.vmem [shape: f32[200,96], index: 3, kind: input, shape index: {}]
  %s4 = inlined_call_operand.vmem [shape: f32[16,32], index: 4, kind: output, shape index: {0}]
  %s5 = inlined_call_operand.hbm [shape: f32[1,2], index: 5, kind: output, shape index: {1}]
  %6 = xla_tuple %s4, %s5
  %s7 = sld [smem:[#allocation0]]
  $region34: #{_lambda_.1} parent=0
    _
  %s9 = ssub.s32 1, %s7
  %s10 = scalar_select 0, %s9, %s7
  $region1: #{_lambda_.1} parent=0
    #allocation2 [shape = 'u8[512]{0}', space=vmem, size = 0x400, scoped, tag = 'output window, operand 1, single buffered']
    #allocation3 [shape = 's32[1]{0}', space=sflag, size = 0x4, scoped, tag = 'scoped memory for _lambda_.1']
    %11 = vsyncpa [#allocation3], 0
    // Predicated region
    $region2: #{_lambda_.1} parent=1 // pred_check
      _
    $region3: #{_lambda_.1} parent=1 // pred_check_branch
      %13 = sbr.rel (0) target = $region5
    $region4: #{_lambda_.1} parent=1 // pred_region
      _
    $region5: #{_lambda_.1} parent=1 // pred_fallthru
      _
    // Predicated region
    $region6: #{_lambda_.1} parent=1 // pred_check
      _
    $region7: #{_lambda_.1} parent=1 // pred_check_branch
      %15 = sbr.rel (0) target = $region9
    $region8: #{_lambda_.1} parent=1 // pred_region
      _
    $region9: #{_lambda_.1} parent=1 // pred_fallthru
      _
    // Predicated region
    $region10: #{_lambda_.1} parent=1 // pred_check
      _
    $region11: #{_lambda_.1} parent=1 // pred_check_branch
      %17 = sbr.rel (0) target = $region13
    $region12: #{_lambda_.1} parent=1 // pred_region
      _
    $region13: #{_lambda_.1} parent=1 // pred_fallthru
      _
    // Predicated region
    $region14: #{_lambda_.1} parent=1 // pred_check
      _
    $region15: #{_lambda_.1} parent=1 // pred_check_branch
      %19 = sbr.rel (0) target = $region17
    $region16: #{_lambda_.1} parent=1 // pred_region
      _
    $region17: #{_lambda_.1} parent=1 // pred_fallthru
      _
    %v20 = vld [vmem:[%s3] sm:$0xff]
    %v21 = vld [vmem:[%s3 + $0x8] sm:$0xff]
    %v22 = vld [vmem:[%s3 + $0x10] sm:$0xff]
    %v23 = vld [vmem:[%s3 + $0x18] sm:$0xff]
    %v24 = vld [vmem:[%s3 + $0xc0] sm:$0x1]
    %v25 = vld [vmem:[%s0] sm:$0xff]
    %v26 = vld [vmem:[%s0 + $0x8] sm:$0xff]
    %v27 = vld [vmem:[%s0 + $0x10] sm:$0xff]
    %v28 = vld [vmem:[%s0 + $0x18] sm:$0xff]
    %v29 = vlaneseq
    %v30 = vshrl.u32 %v29, 7
    %v31 = vsub.s32 0, %v30
    %v32 = vrot.slane %v24, %v31
    %vm33 = vcmask 261120
    %v35 = vsel %vm33, %v25, 0
    %v38 = vsel %vm33, %v26, 0
    %v41 = vsel %vm33, %v27, 0
    %v44 = vsel %vm33, %v28, 0
    %46 = vmatprep.subr.mxu0 0.0
    %47 = vmatpush1.msra.mxu0 %v20
    %48 = vmatprep.subr.mxu0 0.0
    %49 = vmatpush1.msra.mxu0 %v21
    %50 = vmatprep.subr.mxu0 0.0
    %51 = vmatpush1.msra.mxu0 %v22
    %52 = vmatprep.subr.mxu0 0.0
    %53 = vmatpush1.msra.mxu0 %v23
    %54 = vmatprep.subr.mxu0 0.0
    %55 = vmatpush1.msra.mxu0 0.0
    %56 = vmatprep.subr.mxu0 0.0
    %57 = vmatpush1.msra.mxu0 0.0
    %58 = vmatprep.subr.mxu0 0.0
    %59 = vmatpush1.msra.mxu0 0.0
    %60 = vmatprep.subr.mxu0 0.0
    %61 = vmatpush1.msra.mxu0 0.0
    %62 = vmatprep.subr.mxu0 0.0
    %63 = vmatpush1.msra.mxu0 0.0
    %64 = vmatprep.subr.mxu0 0.0
    %65 = vmatpush1.msra.mxu0 0.0
    %66 = vmatprep.subr.mxu0 0.0
    %67 = vmatpush1.msra.mxu0 0.0
    %68 = vmatprep.subr.mxu0 0.0
    %69 = vmatpush1.msra.mxu0 0.0
    %70 = vmatprep.subr.mxu0 0.0
    %71 = vmatpush1.msra.mxu0 0.0
    %72 = vmatprep.subr.mxu0 0.0
    %73 = vmatpush1.msra.mxu0 0.0
    %74 = vmatprep.subr.mxu0 0.0
    %75 = vmatpush1.msra.mxu0 0.0
    %76 = vmatprep.subr.mxu0 0.0
    %77 = vmatpush1.msra.mxu0 0.0
    %78 = vmatprep.subr.mxu0 0.0
    %79 = vmatpush1.msra.mxu0 0.0
    %80 = vmatprep.subr.mxu0 0.0
    %81 = vmatpush1.msra.mxu0 0.0
    %82 = vmatprep.subr.mxu0 0.0
    %83 = vmatpush1.msra.mxu0 0.0
    %84 = vmatprep.subr.mxu0 0.0
    %85 = vmatpush1.msra.mxu0 0.0
    %86 = vmatprep.subr.mxu0 0.0
    %87 = vmatpush1.msra.mxu0 0.0
    %88 = vmatprep.subr.mxu0 0.0
    %89 = vmatpush1.msra.mxu0 0.0
    %90 = vmatprep.subr.mxu0 0.0
    %91 = vmatpush1.msra.mxu0 0.0
    %92 = vmatprep.subr.mxu0 0.0
    %93 = vmatpush1.msra.mxu0 0.0
    %94 = vmatprep.subr.mxu0 0.0
    %95 = vmatpush1.msra.mxu0 0.0
    %96 = vmatprep.subr.mxu0 0.0
    %97 = vmatpush1.msra.mxu0 0.0
    %98 = vmatprep.subr.mxu0 0.0
    %99 = vmatpush1.msra.mxu0 0.0
    %100 = vmatprep.subr.mxu0 0.0
    %101 = vmatpush1.msra.mxu0 0.0
    %102 = vmatprep.subr.mxu0 0.0
    %103 = vmatpush1.msra.mxu0 0.0
    %104 = vmatprep.subr.mxu0 0.0
    %105 = vmatpush1.msra.mxu0 0.0
    %106 = vmatprep.subr.mxu0 0.0
    %107 = vmatpush1.msra.mxu0 0.0
    %108 = vmatprep.subr.mxu0 0.0
    %109 = vmatpush1.msra.mxu0 0.0
    %110 = vmatprep.mubr.f32.mxu0 0.0
    %111 = vmatmul.mubr.f32.gmra.mrb[0].mxu0 %v35
    %v112 = vpop.f32.mrb[0].mxu0
    %v113 = vadd.f32 %v32, %v112
    %v114 = vpop.f32.mrb[0].mxu0
    %115 = vmatprep.mubr.f32.mxu0 0.0
    %116 = vmatmul.mubr.f32.gmra.mrb[0].mxu0 %v38
    %v117 = vpop.f32.mrb[0].mxu0
    %v118 = vadd.f32 %v32, %v117
    %v119 = vpop.f32.mrb[0].mxu0
    %120 = vmatprep.mubr.f32.mxu0 0.0
    %121 = vmatmul.mubr.f32.gmra.mrb[0].mxu0 %v41
    %v122 = vpop.f32.mrb[0].mxu0
    %v123 = vadd.f32 %v32, %v122
    %v124 = vpop.f32.mrb[0].mxu0
    %125 = vmatprep.mubr.f32.mxu0 0.0
    %126 = vmatmul.mubr.f32.gmra.mrb[0].mxu0 %v44
    %v127 = vpop.f32.mrb[0].mxu0
    %v128 = vadd.f32 %v32, %v127
    %v129 = vpop.f32.mrb[0].mxu0
    %130 = vdwg.mxu0
    %v131 = vld [vmem:[%s3 + $0xa0] sm:$0xff]
    %v132 = vld [vmem:[%s3 + $0xa8] sm:$0xff]
    %v133 = vld [vmem:[%s3 + $0xb0] sm:$0xff]
    %v134 = vld [vmem:[%s3 + $0xb8] sm:$0xff]
    %v135 = vmul.f32 %v113, %v131
    %v136 = vmul.f32 %v113, %v132
    %v137 = vmul.f32 %v113, %v133
    %v138 = vmul.f32 %v113, %v134
    %v139 = vmul.f32 %v118, %v131
    %v140 = vmul.f32 %v118, %v132
    %v141 = vmul.f32 %v118, %v133
    %v142 = vmul.f32 %v118, %v134
    %v143 = vld [vmem:[%s1] sm:$0xff]
    %v144 = vld [vmem:[%s1 + $0x8] sm:$0xff]
    %v145 = vld [vmem:[%s1 + $0x10] sm:$0xff]
    %v146 = vld [vmem:[%s1 + $0x18] sm:$0xff]
    %v147 = vld [vmem:[%s1 + $0x20] sm:$0xff]
    %v148 = vld [vmem:[%s1 + $0x28] sm:$0xff]
    %v149 = vld [vmem:[%s1 + $0x30] sm:$0xff]
    %v150 = vld [vmem:[%s1 + $0x38] sm:$0xff]
    %152 = vrot.lane.b32.xlu0 %v123, 96
    %v153 = vpop.permute.xlu0 %152
    %v155 = vsel %vm33, %v135, 0
    %v158 = vsel %vm33, %v136, 0
    %v161 = vsel %vm33, %v137, 0
    %v164 = vsel %vm33, %v138, 0
    %v166 = vsel %vm33, %v153, 0
    %168 = vmatprep.subr.mxu0 0.0
    %169 = vmatpush1.xpose.msra.mxu0 %v166
    %170 = vmatprep.subr.mxu0 0.0
    %171 = vmatpush1.xpose.msra.mxu0 0.0
    %172 = vmatprep.subr.mxu0 0.0
    %173 = vmatpush1.xpose.msra.mxu0 0.0
    %174 = vmatprep.subr.mxu0 0.0
    %175 = vmatpush1.xpose.msra.mxu0 0.0
    %176 = vmatprep.subr.mxu0 0.0
    %177 = vmatpush1.xpose.msra.mxu0 0.0
    %178 = vmatprep.subr.mxu0 0.0
    %179 = vmatpush1.xpose.msra.mxu0 0.0
    %180 = vmatprep.subr.mxu0 0.0
    %181 = vmatpush1.xpose.msra.mxu0 0.0
    %182 = vmatprep.subr.mxu0 0.0
    %183 = vmatpush1.xpose.msra.mxu0 0.0
    %184 = vmatprep.subr.mxu0 0.0
    %185 = vmatpush1.xpose.msra.mxu0 0.0
    %186 = vmatprep.subr.mxu0 0.0
    %187 = vmatpush1.xpose.msra.mxu0 0.0
    %188 = vmatprep.subr.mxu0 0.0
    %189 = vmatpush1.xpose.msra.mxu0 0.0
    %190 = vmatprep.subr.mxu0 0.0
    %191 = vmatpush1.xpose.msra.mxu0 0.0
    %192 = vmatprep.subr.mxu0 0.0
    %193 = vmatpush1.xpose.msra.mxu0 0.0
    %194 = vmatprep.subr.mxu0 0.0
    %195 = vmatpush1.xpose.msra.mxu0 0.0
    %196 = vmatprep.subr.mxu0 0.0
    %197 = vmatpush1.xpose.msra.mxu0 0.0
    %198 = vmatprep.subr.mxu0 0.0
    %199 = vmatpush1.xpose.msra.mxu0 0.0
    %200 = vmatprep.subr.mxu0 0.0
    %201 = vmatpush1.xpose.msra.mxu0 0.0
    %202 = vmatprep.subr.mxu0 0.0
    %203 = vmatpush1.xpose.msra.mxu0 0.0
    %204 = vmatprep.subr.mxu0 0.0
    %205 = vmatpush1.xpose.msra.mxu0 0.0
    %206 = vmatprep.subr.mxu0 0.0
    %207 = vmatpush1.xpose.msra.mxu0 0.0
    %208 = vmatprep.subr.mxu0 0.0
    %209 = vmatpush1.xpose.msra.mxu0 0.0
    %210 = vmatprep.subr.mxu0 0.0
    %211 = vmatpush1.xpose.msra.mxu0 0.0
    %212 = vmatprep.subr.mxu0 0.0
    %213 = vmatpush1.xpose.msra.mxu0 0.0
    %214 = vmatprep.subr.mxu0 0.0
    %215 = vmatpush1.xpose.msra.mxu0 0.0
    %216 = vmatprep.subr.mxu0 0.0
    %217 = vmatpush1.xpose.msra.mxu0 0.0
    %218 = vmatprep.subr.mxu0 0.0
    %219 = vmatpush1.xpose.msra.mxu0 0.0
    %220 = vmatprep.subr.mxu0 0.0
    %221 = vmatpush1.xpose.msra.mxu0 0.0
    %222 = vmatprep.subr.mxu0 0.0
    %223 = vmatpush1.xpose.msra.mxu0 0.0
    %224 = vmatprep.subr.mxu0 0.0
    %225 = vmatpush1.xpose.msra.mxu0 0.0
    %226 = vmatprep.subr.mxu0 0.0
    %227 = vmatpush1.xpose.msra.mxu0 0.0
    %228 = vmatprep.subr.mxu0 0.0
    %229 = vmatpush1.xpose.msra.mxu0 0.0
    %230 = vmatprep.subr.mxu0 0.0
    %231 = vmatpush1.xpose.msra.mxu0 0.0
    %232 = vmatprep.mubr.f32.mxu0 0.0
    %233 = vmatmul.mubr.f32.gmra.mrb[0].mxu0 %v155
    %v234 = vpop.f32.mrb[0].mxu0
    %v235 = vadd.f32 %v143, %v234
    %v236 = vpop.f32.mrb[0].mxu0
    %237 = vmatprep.mubr.f32.mxu0 0.0
    %238 = vmatmul.mubr.f32.gmra.mrb[0].mxu0 %v158
    %v239 = vpop.f32.mrb[0].mxu0
    %v240 = vadd.f32 %v144, %v239
    %v241 = vpop.f32.mrb[0].mxu0
    %242 = vmatprep.mubr.f32.mxu0 0.0
    %243 = vmatmul.mubr.f32.gmra.mrb[0].mxu0 %v161
    %v244 = vpop.f32.mrb[0].mxu0
    %v245 = vadd.f32 %v145, %v244
    %v246 = vpop.f32.mrb[0].mxu0
    %247 = vmatprep.mubr.f32.mxu0 0.0
    %248 = vmatmul.mubr.f32.gmra.mrb[0].mxu0 %v164
    %v249 = vpop.f32.mrb[0].mxu0
    %v250 = vadd.f32 %v146, %v249
    %v251 = vpop.f32.mrb[0].mxu0
    %252 = vdwg.mxu0
    %254 = vrot.lane.b32.xlu0 %v128, 96
    %v255 = vpop.permute.xlu0 %254
    %v257 = vsel %vm33, %v139, 0
    %v260 = vsel %vm33, %v140, 0
    %v263 = vsel %vm33, %v141, 0
    %v266 = vsel %vm33, %v142, 0
    %v268 = vsel %vm33, %v255, 0
    %270 = vmatprep.subr.mxu0 0.0
    %271 = vmatpush1.xpose.msra.mxu0 %v268
    %272 = vmatprep.subr.mxu0 0.0
    %273 = vmatpush1.xpose.msra.mxu0 0.0
    %274 = vmatprep.subr.mxu0 0.0
    %275 = vmatpush1.xpose.msra.mxu0 0.0
    %276 = vmatprep.subr.mxu0 0.0
    %277 = vmatpush1.xpose.msra.mxu0 0.0
    %278 = vmatprep.subr.mxu0 0.0
    %279 = vmatpush1.xpose.msra.mxu0 0.0
    %280 = vmatprep.subr.mxu0 0.0
    %281 = vmatpush1.xpose.msra.mxu0 0.0
    %282 = vmatprep.subr.mxu0 0.0
    %283 = vmatpush1.xpose.msra.mxu0 0.0
    %284 = vmatprep.subr.mxu0 0.0
    %285 = vmatpush1.xpose.msra.mxu0 0.0
    %286 = vmatprep.subr.mxu0 0.0
    %287 = vmatpush1.xpose.msra.mxu0 0.0
    %288 = vmatprep.subr.mxu0 0.0
    %289 = vmatpush1.xpose.msra.mxu0 0.0
    %290 = vmatprep.subr.mxu0 0.0
    %291 = vmatpush1.xpose.msra.mxu0 0.0
    %292 = vmatprep.subr.mxu0 0.0
    %293 = vmatpush1.xpose.msra.mxu0 0.0
    %294 = vmatprep.subr.mxu0 0.0
    %295 = vmatpush1.xpose.msra.mxu0 0.0
    %296 = vmatprep.subr.mxu0 0.0
    %297 = vmatpush1.xpose.msra.mxu0 0.0
    %298 = vmatprep.subr.mxu0 0.0
    %299 = vmatpush1.xpose.msra.mxu0 0.0
    %300 = vmatprep.subr.mxu0 0.0
    %301 = vmatpush1.xpose.msra.mxu0 0.0
    %302 = vmatprep.subr.mxu0 0.0
    %303 = vmatpush1.xpose.msra.mxu0 0.0
    %304 = vmatprep.subr.mxu0 0.0
    %305 = vmatpush1.xpose.msra.mxu0 0.0
    %306 = vmatprep.subr.mxu0 0.0
    %307 = vmatpush1.xpose.msra.mxu0 0.0
    %308 = vmatprep.subr.mxu0 0.0
    %309 = vmatpush1.xpose.msra.mxu0 0.0
    %310 = vmatprep.subr.mxu0 0.0
    %311 = vmatpush1.xpose.msra.mxu0 0.0
    %312 = vmatprep.subr.mxu0 0.0
    %313 = vmatpush1.xpose.msra.mxu0 0.0
    %314 = vmatprep.subr.mxu0 0.0
    %315 = vmatpush1.xpose.msra.mxu0 0.0
    %316 = vmatprep.subr.mxu0 0.0
    %317 = vmatpush1.xpose.msra.mxu0 0.0
    %318 = vmatprep.subr.mxu0 0.0
    %319 = vmatpush1.xpose.msra.mxu0 0.0
    %320 = vmatprep.subr.mxu0 0.0
    %321 = vmatpush1.xpose.msra.mxu0 0.0
    %322 = vmatprep.subr.mxu0 0.0
    %323 = vmatpush1.xpose.msra.mxu0 0.0
    %324 = vmatprep.subr.mxu0 0.0
    %325 = vmatpush1.xpose.msra.mxu0 0.0
    %326 = vmatprep.subr.mxu0 0.0
    %327 = vmatpush1.xpose.msra.mxu0 0.0
    %328 = vmatprep.subr.mxu0 0.0
    %329 = vmatpush1.xpose.msra.mxu0 0.0
    %330 = vmatprep.subr.mxu0 0.0
    %331 = vmatpush1.xpose.msra.mxu0 0.0
    %332 = vmatprep.subr.mxu0 0.0
    %333 = vmatpush1.xpose.msra.mxu0 0.0
    %334 = vmatprep.mubr.f32.mxu0 0.0
    %335 = vmatmul.mubr.f32.gmra.mrb[0].mxu0 %v257
    %v336 = vpop.f32.mrb[0].mxu0
    %v337 = vadd.f32 %v147, %v336
    %v338 = vpop.f32.mrb[0].mxu0
    %339 = vmatprep.mubr.f32.mxu0 0.0
    %340 = vmatmul.mubr.f32.gmra.mrb[0].mxu0 %v260
    %v341 = vpop.f32.mrb[0].mxu0
    %v342 = vadd.f32 %v148, %v341
    %v343 = vpop.f32.mrb[0].mxu0
    %344 = vmatprep.mubr.f32.mxu0 0.0
    %345 = vmatmul.mubr.f32.gmra.mrb[0].mxu0 %v263
    %v346 = vpop.f32.mrb[0].mxu0
    %v347 = vadd.f32 %v149, %v346
    %v348 = vpop.f32.mrb[0].mxu0
    %349 = vmatprep.mubr.f32.mxu0 0.0
    %350 = vmatmul.mubr.f32.gmra.mrb[0].mxu0 %v266
    %v351 = vpop.f32.mrb[0].mxu0
    %v352 = vadd.f32 %v150, %v351
    %v353 = vpop.f32.mrb[0].mxu0
    %354 = vdwg.mxu0
    %vm355 = vcmask 64512
    %v356 = vsel %vm355, %v235, -inf
    %357 = vmax.xlane.f32.xlu0 %v356
    %v358 = vpop.xlane.xlu0 %357
    %v359 = vsel %vm355, %v240, -inf
    %360 = vmax.xlane.f32.xlu0 %v359
    %v361 = vpop.xlane.xlu0 %360
    %v362 = vsel %vm355, %v245, -inf
    %363 = vmax.xlane.f32.xlu0 %v362
    %v364 = vpop.xlane.xlu0 %363
    %v365 = vsel %vm355, %v250, -inf
    %366 = vmax.xlane.f32.xlu0 %v365
    %v367 = vpop.xlane.xlu0 %366
    %v368 = vsel %vm355, %v337, -inf
    %369 = vmax.xlane.f32.xlu0 %v368
    %v370 = vpop.xlane.xlu0 %369
    %v371 = vsel %vm355, %v342, -inf
    %372 = vmax.xlane.f32.xlu0 %v371
    %v373 = vpop.xlane.xlu0 %372
    %v374 = vsel %vm355, %v347, -inf
    %375 = vmax.xlane.f32.xlu0 %v374
    %v376 = vpop.xlane.xlu0 %375
    %v377 = vsel %vm355, %v352, -inf
    %378 = vmax.xlane.f32.xlu0 %v377
    %v379 = vpop.xlane.xlu0 %378
    %v380 = vsub.f32 %v235, %v358
    %v381 = vsub.f32 %v240, %v361
    %v382 = vsub.f32 %v245, %v364
    %v383 = vsub.f32 %v250, %v367
    %v384 = vsub.f32 %v337, %v370
    %v385 = vsub.f32 %v342, %v373
    %v386 = vsub.f32 %v347, %v376
    %v387 = vsub.f32 %v352, %v379
    %v388 = vmul.f32 %v380, 1.442695
    %v389 = vpow.pop %v388
    %v390 = vmul.f32 %v381, 1.442695
    %v391 = vpow.pop %v390
    %v392 = vmul.f32 %v382, 1.442695
    %v393 = vpow.pop %v392
    %v394 = vmul.f32 %v383, 1.442695
    %v395 = vpow.pop %v394
    %v396 = vmul.f32 %v384, 1.442695
    %v397 = vpow.pop %v396
    %v398 = vmul.f32 %v385, 1.442695
    %v399 = vpow.pop %v398
    %v400 = vmul.f32 %v386, 1.442695
    %v401 = vpow.pop %v400
    %v402 = vmul.f32 %v387, 1.442695
    %v403 = vpow.pop %v402
    %v404 = vsel %vm355, %v389, 0.0
    %405 = vadd.xlane.f32.xlu0 %v404
    %v406 = vpop.xlane.xlu0 %405
    %v407 = vsel %vm355, %v391, 0.0
    %408 = vadd.xlane.f32.xlu0 %v407
    %v409 = vpop.xlane.xlu0 %408
    %v410 = vsel %vm355, %v393, 0.0
    %411 = vadd.xlane.f32.xlu0 %v410
    %v412 = vpop.xlane.xlu0 %411
    %v413 = vsel %vm355, %v395, 0.0
    %414 = vadd.xlane.f32.xlu0 %v413
    %v415 = vpop.xlane.xlu0 %414
    %v416 = vsel %vm355, %v397, 0.0
    %417 = vadd.xlane.f32.xlu0 %v416
    %v418 = vpop.xlane.xlu0 %417
    %v419 = vsel %vm355, %v399, 0.0
    %420 = vadd.xlane.f32.xlu0 %v419
    %v421 = vpop.xlane.xlu0 %420
    %v422 = vsel %vm355, %v401, 0.0
    %423 = vadd.xlane.f32.xlu0 %v422
    %v424 = vpop.xlane.xlu0 %423
    %v425 = vsel %vm355, %v403, 0.0
    %426 = vadd.xlane.f32.xlu0 %v425
    %v427 = vpop.xlane.xlu0 %426
    %v428 = vrcp.pop %v406
    %v429 = vmul.f32 %v389, %v428
    %v430 = vrcp.pop %v409
    %v431 = vmul.f32 %v391, %v430
    %v432 = vrcp.pop %v412
    %v433 = vmul.f32 %v393, %v432
    %v434 = vrcp.pop %v415
    %v435 = vmul.f32 %v395, %v434
    %v436 = vrcp.pop %v418
    %v437 = vmul.f32 %v397, %v436
    %v438 = vrcp.pop %v421
    %v439 = vmul.f32 %v399, %v438
    %v440 = vrcp.pop %v424
    %v441 = vmul.f32 %v401, %v440
    %v442 = vrcp.pop %v427
    %v443 = vmul.f32 %v403, %v442
    %444 = vrot.lane.b32.xlu0 %v123, 64
    %v445 = vpop.permute.xlu0 %444
    %v448 = vsel %vm355, %v429, 0
    %v451 = vsel %vm355, %v431, 0
    %v454 = vsel %vm355, %v433, 0
    %v457 = vsel %vm355, %v435, 0
    %459 = vmatprep.subr.mxu0 0.0
    %460 = vmatpush1.msra.mxu0 %v445
    %461 = vmatprep.subr.mxu0 0.0
    %462 = vmatpush1.msra.mxu0 0.0
    %463 = vmatprep.subr.mxu0 0.0
    %464 = vmatpush1.msra.mxu0 0.0
    %465 = vmatprep.subr.mxu0 0.0
    %466 = vmatpush1.msra.mxu0 0.0
    %467 = vmatprep.subr.mxu0 0.0
    %468 = vmatpush1.msra.mxu0 0.0
    %469 = vmatprep.subr.mxu0 0.0
    %470 = vmatpush1.msra.mxu0 0.0
    %471 = vmatprep.subr.mxu0 0.0
    %472 = vmatpush1.msra.mxu0 0.0
    %473 = vmatprep.subr.mxu0 0.0
    %474 = vmatpush1.msra.mxu0 0.0
    %475 = vmatprep.subr.mxu0 0.0
    %476 = vmatpush1.msra.mxu0 0.0
    %477 = vmatprep.subr.mxu0 0.0
    %478 = vmatpush1.msra.mxu0 0.0
    %479 = vmatprep.subr.mxu0 0.0
    %480 = vmatpush1.msra.mxu0 0.0
    %481 = vmatprep.subr.mxu0 0.0
    %482 = vmatpush1.msra.mxu0 0.0
    %483 = vmatprep.subr.mxu0 0.0
    %484 = vmatpush1.msra.mxu0 0.0
    %485 = vmatprep.subr.mxu0 0.0
    %486 = vmatpush1.msra.mxu0 0.0
    %487 = vmatprep.subr.mxu0 0.0
    %488 = vmatpush1.msra.mxu0 0.0
    %489 = vmatprep.subr.mxu0 0.0
    %490 = vmatpush1.msra.mxu0 0.0
    %491 = vmatprep.subr.mxu0 0.0
    %492 = vmatpush1.msra.mxu0 0.0
    %493 = vmatprep.subr.mxu0 0.0
    %494 = vmatpush1.msra.mxu0 0.0
    %495 = vmatprep.subr.mxu0 0.0
    %496 = vmatpush1.msra.mxu0 0.0
    %497 = vmatprep.subr.mxu0 0.0
    %498 = vmatpush1.msra.mxu0 0.0
    %499 = vmatprep.subr.mxu0 0.0
    %500 = vmatpush1.msra.mxu0 0.0
    %501 = vmatprep.subr.mxu0 0.0
    %502 = vmatpush1.msra.mxu0 0.0
    %503 = vmatprep.subr.mxu0 0.0
    %504 = vmatpush1.msra.mxu0 0.0
    %505 = vmatprep.subr.mxu0 0.0
    %506 = vmatpush1.msra.mxu0 0.0
    %507 = vmatprep.subr.mxu0 0.0
    %508 = vmatpush1.msra.mxu0 0.0
    %509 = vmatprep.subr.mxu0 0.0
    %510 = vmatpush1.msra.mxu0 0.0
    %511 = vmatprep.subr.mxu0 0.0
    %512 = vmatpush1.msra.mxu0 0.0
    %513 = vmatprep.subr.mxu0 0.0
    %514 = vmatpush1.msra.mxu0 0.0
    %515 = vmatprep.subr.mxu0 0.0
    %516 = vmatpush1.msra.mxu0 0.0
    %517 = vmatprep.subr.mxu0 0.0
    %518 = vmatpush1.msra.mxu0 0.0
    %519 = vmatprep.subr.mxu0 0.0
    %520 = vmatpush1.msra.mxu0 0.0
    %521 = vmatprep.subr.mxu0 0.0
    %522 = vmatpush1.msra.mxu0 0.0
    %523 = vmatprep.mubr.f32.mxu0 0.0
    %524 = vmatmul.mubr.f32.gmra.mrb[0].mxu0 %v448
    %v525 = vpop.f32.mrb[0].mxu0
    %v526 = vadd.f32 0.0, %v525
    %v527 = vpop.f32.mrb[0].mxu0
    %528 = vmatprep.mubr.f32.mxu0 0.0
    %529 = vmatmul.mubr.f32.gmra.mrb[0].mxu0 %v451
    %v530 = vpop.f32.mrb[0].mxu0
    %v531 = vadd.f32 0.0, %v530
    %v532 = vpop.f32.mrb[0].mxu0
    %533 = vmatprep.mubr.f32.mxu0 0.0
    %534 = vmatmul.mubr.f32.gmra.mrb[0].mxu0 %v454
    %v535 = vpop.f32.mrb[0].mxu0
    %v536 = vadd.f32 0.0, %v535
    %v537 = vpop.f32.mrb[0].mxu0
    %538 = vmatprep.mubr.f32.mxu0 0.0
    %539 = vmatmul.mubr.f32.gmra.mrb[0].mxu0 %v457
    %v540 = vpop.f32.mrb[0].mxu0
    %v541 = vadd.f32 0.0, %v540
    %v542 = vpop.f32.mrb[0].mxu0
    %543 = vdwg.mxu0
    %544 = vrot.lane.b32.xlu0 %v128, 64
    %v545 = vpop.permute.xlu0 %544
    %v548 = vsel %vm355, %v437, 0
    %v551 = vsel %vm355, %v439, 0
    %v554 = vsel %vm355, %v441, 0
    %v557 = vsel %vm355, %v443, 0
    %559 = vmatprep.subr.mxu0 0.0
    %560 = vmatpush1.msra.mxu0 %v545
    %561 = vmatprep.subr.mxu0 0.0
    %562 = vmatpush1.msra.mxu0 0.0
    %563 = vmatprep.subr.mxu0 0.0
    %564 = vmatpush1.msra.mxu0 0.0
    %565 = vmatprep.subr.mxu0 0.0
    %566 = vmatpush1.msra.mxu0 0.0
    %567 = vmatprep.subr.mxu0 0.0
    %568 = vmatpush1.msra.mxu0 0.0
    %569 = vmatprep.subr.mxu0 0.0
    %570 = vmatpush1.msra.mxu0 0.0
    %571 = vmatprep.subr.mxu0 0.0
    %572 = vmatpush1.msra.mxu0 0.0
    %573 = vmatprep.subr.mxu0 0.0
    %574 = vmatpush1.msra.mxu0 0.0
    %575 = vmatprep.subr.mxu0 0.0
    %576 = vmatpush1.msra.mxu0 0.0
    %577 = vmatprep.subr.mxu0 0.0
    %578 = vmatpush1.msra.mxu0 0.0
    %579 = vmatprep.subr.mxu0 0.0
    %580 = vmatpush1.msra.mxu0 0.0
    %581 = vmatprep.subr.mxu0 0.0
    %582 = vmatpush1.msra.mxu0 0.0
    %583 = vmatprep.subr.mxu0 0.0
    %584 = vmatpush1.msra.mxu0 0.0
    %585 = vmatprep.subr.mxu0 0.0
    %586 = vmatpush1.msra.mxu0 0.0
    %587 = vmatprep.subr.mxu0 0.0
    %588 = vmatpush1.msra.mxu0 0.0
    %589 = vmatprep.subr.mxu0 0.0
    %590 = vmatpush1.msra.mxu0 0.0
    %591 = vmatprep.subr.mxu0 0.0
    %592 = vmatpush1.msra.mxu0 0.0
    %593 = vmatprep.subr.mxu0 0.0
    %594 = vmatpush1.msra.mxu0 0.0
    %595 = vmatprep.subr.mxu0 0.0
    %596 = vmatpush1.msra.mxu0 0.0
    %597 = vmatprep.subr.mxu0 0.0
    %598 = vmatpush1.msra.mxu0 0.0
    %599 = vmatprep.subr.mxu0 0.0
    %600 = vmatpush1.msra.mxu0 0.0
    %601 = vmatprep.subr.mxu0 0.0
    %602 = vmatpush1.msra.mxu0 0.0
    %603 = vmatprep.subr.mxu0 0.0
    %604 = vmatpush1.msra.mxu0 0.0
    %605 = vmatprep.subr.mxu0 0.0
    %606 = vmatpush1.msra.mxu0 0.0
    %607 = vmatprep.subr.mxu0 0.0
    %608 = vmatpush1.msra.mxu0 0.0
    %609 = vmatprep.subr.mxu0 0.0
    %610 = vmatpush1.msra.mxu0 0.0
    %611 = vmatprep.subr.mxu0 0.0
    %612 = vmatpush1.msra.mxu0 0.0
    %613 = vmatprep.subr.mxu0 0.0
    %614 = vmatpush1.msra.mxu0 0.0
    %615 = vmatprep.subr.mxu0 0.0
    %616 = vmatpush1.msra.mxu0 0.0
    %617 = vmatprep.subr.mxu0 0.0
    %618 = vmatpush1.msra.mxu0 0.0
    %619 = vmatprep.subr.mxu0 0.0
    %620 = vmatpush1.msra.mxu0 0.0
    %621 = vmatprep.subr.mxu0 0.0
    %622 = vmatpush1.msra.mxu0 0.0
    %623 = vmatprep.mubr.f32.mxu0 0.0
    %624 = vmatmul.mubr.f32.gmra.mrb[0].mxu0 %v548
    %v625 = vpop.f32.mrb[0].mxu0
    %v626 = vadd.f32 0.0, %v625
    %v627 = vpop.f32.mrb[0].mxu0
    %628 = vmatprep.mubr.f32.mxu0 0.0
    %629 = vmatmul.mubr.f32.gmra.mrb[0].mxu0 %v551
    %v630 = vpop.f32.mrb[0].mxu0
    %v631 = vadd.f32 0.0, %v630
    %v632 = vpop.f32.mrb[0].mxu0
    %633 = vmatprep.mubr.f32.mxu0 0.0
    %634 = vmatmul.mubr.f32.gmra.mrb[0].mxu0 %v554
    %v635 = vpop.f32.mrb[0].mxu0
    %v636 = vadd.f32 0.0, %v635
    %v637 = vpop.f32.mrb[0].mxu0
    %638 = vmatprep.mubr.f32.mxu0 0.0
    %639 = vmatmul.mubr.f32.gmra.mrb[0].mxu0 %v557
    %v640 = vpop.f32.mrb[0].mxu0
    %v641 = vadd.f32 0.0, %v640
    %v642 = vpop.f32.mrb[0].mxu0
    %643 = vdwg.mxu0
    %v644 = vmul.f32 %v526, %v131
    %v645 = vmul.f32 %v531, %v132
    %v646 = vmul.f32 %v536, %v133
    %v647 = vmul.f32 %v541, %v134
    %v648 = vmul.f32 %v626, %v131
    %v649 = vmul.f32 %v631, %v132
    %v650 = vmul.f32 %v636, %v133
    %v651 = vmul.f32 %v641, %v134
    %v652 = vadd.f32 %v644, %v645
    %v653 = vadd.f32 %v648, %v649
    %v654 = vadd.f32 %v652, %v646
    %v655 = vadd.f32 %v653, %v650
    %v656 = vadd.f32 %v654, %v647
    %v657 = vadd.f32 %v655, %v651
    %v658 = vld [vmem:[%s3 + $0x20] sm:$0xff]
    %v659 = vld [vmem:[%s3 + $0x28] sm:$0xff]
    %v660 = vld [vmem:[%s3 + $0x30] sm:$0xff]
    %v661 = vld [vmem:[%s3 + $0x38] sm:$0xff]
    %v662 = vld [vmem:[%s3 + $0xc1] sm:$0x1]
    %v663 = vlaneseq
    %v664 = vshrl.u32 %v663, 7
    %v665 = vsub.s32 0, %v664
    %v666 = vrot.slane %v662, %v665
    %v668 = vsel %vm33, %v656, 0
    %v671 = vsel %vm33, %v657, 0
    %673 = vmatprep.subr.mxu0 0.0
    %674 = vmatpush1.msra.mxu0 %v658
    %675 = vmatprep.subr.mxu0 0.0
    %676 = vmatpush1.msra.mxu0 %v659
    %677 = vmatprep.subr.mxu0 0.0
    %678 = vmatpush1.msra.mxu0 %v660
    %679 = vmatprep.subr.mxu0 0.0
    %680 = vmatpush1.msra.mxu0 %v661
    %681 = vmatprep.subr.mxu0 0.0
    %682 = vmatpush1.msra.mxu0 0.0
    %683 = vmatprep.subr.mxu0 0.0
    %684 = vmatpush1.msra.mxu0 0.0
    %685 = vmatprep.subr.mxu0 0.0
    %686 = vmatpush1.msra.mxu0 0.0
    %687 = vmatprep.subr.mxu0 0.0
    %688 = vmatpush1.msra.mxu0 0.0
    %689 = vmatprep.subr.mxu0 0.0
    %690 = vmatpush1.msra.mxu0 0.0
    %691 = vmatprep.subr.mxu0 0.0
    %692 = vmatpush1.msra.mxu0 0.0
    %693 = vmatprep.subr.mxu0 0.0
    %694 = vmatpush1.msra.mxu0 0.0
    %695 = vmatprep.subr.mxu0 0.0
    %696 = vmatpush1.msra.mxu0 0.0
    %697 = vmatprep.subr.mxu0 0.0
    %698 = vmatpush1.msra.mxu0 0.0
    %699 = vmatprep.subr.mxu0 0.0
    %700 = vmatpush1.msra.mxu0 0.0
    %701 = vmatprep.subr.mxu0 0.0
    %702 = vmatpush1.msra.mxu0 0.0
    %703 = vmatprep.subr.mxu0 0.0
    %704 = vmatpush1.msra.mxu0 0.0
    %705 = vmatprep.subr.mxu0 0.0
    %706 = vmatpush1.msra.mxu0 0.0
    %707 = vmatprep.subr.mxu0 0.0
    %708 = vmatpush1.msra.mxu0 0.0
    %709 = vmatprep.subr.mxu0 0.0
    %710 = vmatpush1.msra.mxu0 0.0
    %711 = vmatprep.subr.mxu0 0.0
    %712 = vmatpush1.msra.mxu0 0.0
    %713 = vmatprep.subr.mxu0 0.0
    %714 = vmatpush1.msra.mxu0 0.0
    %715 = vmatprep.subr.mxu0 0.0
    %716 = vmatpush1.msra.mxu0 0.0
    %717 = vmatprep.subr.mxu0 0.0
    %718 = vmatpush1.msra.mxu0 0.0
    %719 = vmatprep.subr.mxu0 0.0
    %720 = vmatpush1.msra.mxu0 0.0
    %721 = vmatprep.subr.mxu0 0.0
    %722 = vmatpush1.msra.mxu0 0.0
    %723 = vmatprep.subr.mxu0 0.0
    %724 = vmatpush1.msra.mxu0 0.0
    %725 = vmatprep.subr.mxu0 0.0
    %726 = vmatpush1.msra.mxu0 0.0
    %727 = vmatprep.subr.mxu0 0.0
    %728 = vmatpush1.msra.mxu0 0.0
    %729 = vmatprep.subr.mxu0 0.0
    %730 = vmatpush1.msra.mxu0 0.0
    %731 = vmatprep.subr.mxu0 0.0
    %732 = vmatpush1.msra.mxu0 0.0
    %733 = vmatprep.subr.mxu0 0.0
    %734 = vmatpush1.msra.mxu0 0.0
    %735 = vmatprep.subr.mxu0 0.0
    %736 = vmatpush1.msra.mxu0 0.0
    %737 = vmatprep.mubr.f32.mxu0 0.0
    %738 = vmatmul.mubr.f32.gmra.mrb[0].mxu0 %v668
    %v739 = vpop.f32.mrb[0].mxu0
    %v740 = vadd.f32 %v666, %v739
    %v741 = vpop.f32.mrb[0].mxu0
    %742 = vmatprep.mubr.f32.mxu0 0.0
    %743 = vmatmul.mubr.f32.gmra.mrb[0].mxu0 %v671
    %v744 = vpop.f32.mrb[0].mxu0
    %v745 = vadd.f32 %v666, %v744
    %v746 = vpop.f32.mrb[0].mxu0
    %747 = vdwg.mxu0
    %v748 = vld [vmem:[%s3 + $0xc2] sm:$0x1]
    %v749 = vld [vmem:[%s3 + $0xc3] sm:$0x1]
    %v750 = vld [vmem:[%s3 + $0xc4] sm:$0x1]
    %v751 = vld [vmem:[%s3 + $0xc5] sm:$0x1]
    %v752 = vld [vmem:[%s3 + $0xc6] sm:$0x1]
    %v753 = vld [vmem:[%s3 + $0xc7] sm:$0x1]
    %v754 = vld [vmem:[%s3 + $0x40] sm:$0xff]
    %v755 = vld [vmem:[%s3 + $0x48] sm:$0xff]
    %v756 = vld [vmem:[%s3 + $0x50] sm:$0xff]
    %v757 = vld [vmem:[%s3 + $0x58] sm:$0xff]
    %v758 = vld [vmem:[%s3 + $0x60] sm:$0xff]
    %v759 = vld [vmem:[%s3 + $0x68] sm:$0xff]
    %v760 = vld [vmem:[%s3 + $0x70] sm:$0xff]
    %v761 = vld [vmem:[%s3 + $0x78] sm:$0xff]
    %v762 = vld [vmem:[%s3 + $0x80] sm:$0xff]
    %v763 = vld [vmem:[%s3 + $0x88] sm:$0xff]
    %v764 = vld [vmem:[%s3 + $0x90] sm:$0xff]
    %v765 = vld [vmem:[%s3 + $0x98] sm:$0xff]
    %v766 = vld [vmem:[%s0] sm:$0xff]
    %v767 = vld [vmem:[%s0 + $0x8] sm:$0xff]
    %v768 = vadd.f32 %v766, %v740
    %v769 = vadd.f32 %v767, %v745
    %v770 = vsel %vm33, %v768, 0.0
    %771 = vadd.xlane.f32.xlu0 %v770
    %v772 = vpop.xlane.xlu0 %771
    %v773 = vsel %vm33, %v769, 0.0
    %774 = vadd.xlane.f32.xlu0 %v773
    %v775 = vpop.xlane.xlu0 %774
    %v776 = vrcp.pop 32.0
    %v777 = vmul.f32 %v772, %v776
    %v778 = vmul.f32 %v775, %v776
    %v779 = vsub.f32 %v768, %v777
    %v780 = vsub.f32 %v769, %v778
    %v781 = vmul.f32 %v779, %v779
    %v782 = vmul.f32 %v780, %v780
    %v783 = vsel %vm33, %v781, 0.0
    %784 = vadd.xlane.f32.xlu0 %v783
    %v785 = vpop.xlane.xlu0 %784
    %v786 = vsel %vm33, %v782, 0.0
    %787 = vadd.xlane.f32.xlu0 %v786
    %v788 = vpop.xlane.xlu0 %787
    %v789 = vmul.f32 %v785, %v776
    %v790 = vmul.f32 %v788, %v776
    %v791 = vadd.f32 %v789, 1e-05
    %v792 = vadd.f32 %v790, 1e-05
    %v793 = vrsqrt.pop %v791
    %v794 = vrsqrt.pop %v792
    %v795 = vmul.f32 %v779, %v793
    %v796 = vmul.f32 %v780, %v794
    %v797 = vlaneseq
    %v798 = vshrl.u32 %v797, 7
    %v799 = vsub.s32 0, %v798
    %v800 = vrot.slane %v748, %v799
    %v801 = vmul.f32 %v795, %v800
    %v802 = vmul.f32 %v796, %v800
    %v803 = vlaneseq
    %v804 = vshrl.u32 %v803, 7
    %v805 = vsub.s32 0, %v804
    %v806 = vrot.slane %v749, %v805
    %v807 = vadd.f32 %v801, %v806
    %v808 = vadd.f32 %v802, %v806
    %v809 = vlaneseq
    %v810 = vshrl.u32 %v809, 7
    %v811 = vsub.s32 0, %v810
    %v812 = vrot.slane %v750, %v811
    %v814 = vsel %vm33, %v807, 0
    %v817 = vsel %vm33, %v808, 0
    %819 = vmatprep.subr.mxu0 0.0
    %820 = vmatpush1.msra.mxu0 %v754
    %821 = vmatprep.subr.mxu0 0.0
    %822 = vmatpush1.msra.mxu0 %v755
    %823 = vmatprep.subr.mxu0 0.0
    %824 = vmatpush1.msra.mxu0 %v756
    %825 = vmatprep.subr.mxu0 0.0
    %826 = vmatpush1.msra.mxu0 %v757
    %827 = vmatprep.subr.mxu0 0.0
    %828 = vmatpush1.msra.mxu0 0.0
    %829 = vmatprep.subr.mxu0 0.0
    %830 = vmatpush1.msra.mxu0 0.0
    %831 = vmatprep.subr.mxu0 0.0
    %832 = vmatpush1.msra.mxu0 0.0
    %833 = vmatprep.subr.mxu0 0.0
    %834 = vmatpush1.msra.mxu0 0.0
    %835 = vmatprep.subr.mxu0 0.0
    %836 = vmatpush1.msra.mxu0 0.0
    %837 = vmatprep.subr.mxu0 0.0
    %838 = vmatpush1.msra.mxu0 0.0
    %839 = vmatprep.subr.mxu0 0.0
    %840 = vmatpush1.msra.mxu0 0.0
    %841 = vmatprep.subr.mxu0 0.0
    %842 = vmatpush1.msra.mxu0 0.0
    %843 = vmatprep.subr.mxu0 0.0
    %844 = vmatpush1.msra.mxu0 0.0
    %845 = vmatprep.subr.mxu0 0.0
    %846 = vmatpush1.msra.mxu0 0.0
    %847 = vmatprep.subr.mxu0 0.0
    %848 = vmatpush1.msra.mxu0 0.0
    %849 = vmatprep.subr.mxu0 0.0
    %850 = vmatpush1.msra.mxu0 0.0
    %851 = vmatprep.subr.mxu0 0.0
    %852 = vmatpush1.msra.mxu0 0.0
    %853 = vmatprep.subr.mxu0 0.0
    %854 = vmatpush1.msra.mxu0 0.0
    %855 = vmatprep.subr.mxu0 0.0
    %856 = vmatpush1.msra.mxu0 0.0
    %857 = vmatprep.subr.mxu0 0.0
    %858 = vmatpush1.msra.mxu0 0.0
    %859 = vmatprep.subr.mxu0 0.0
    %860 = vmatpush1.msra.mxu0 0.0
    %861 = vmatprep.subr.mxu0 0.0
    %862 = vmatpush1.msra.mxu0 0.0
    %863 = vmatprep.subr.mxu0 0.0
    %864 = vmatpush1.msra.mxu0 0.0
    %865 = vmatprep.subr.mxu0 0.0
    %866 = vmatpush1.msra.mxu0 0.0
    %867 = vmatprep.subr.mxu0 0.0
    %868 = vmatpush1.msra.mxu0 0.0
    %869 = vmatprep.subr.mxu0 0.0
    %870 = vmatpush1.msra.mxu0 0.0
    %871 = vmatprep.subr.mxu0 0.0
    %872 = vmatpush1.msra.mxu0 0.0
    %873 = vmatprep.subr.mxu0 0.0
    %874 = vmatpush1.msra.mxu0 0.0
    %875 = vmatprep.subr.mxu0 0.0
    %876 = vmatpush1.msra.mxu0 0.0
    %877 = vmatprep.subr.mxu0 0.0
    %878 = vmatpush1.msra.mxu0 0.0
    %879 = vmatprep.subr.mxu0 0.0
    %880 = vmatpush1.msra.mxu0 0.0
    %881 = vmatprep.subr.mxu0 0.0
    %882 = vmatpush1.msra.mxu0 0.0
    %883 = vmatprep.mubr.f32.mxu0 0.0
    %884 = vmatmul.mubr.f32.gmra.mrb[0].mxu0 %v814
    %v885 = vpop.f32.mrb[0].mxu0
    %v886 = vadd.f32 %v812, %v885
    %v887 = vpop.f32.mrb[0].mxu0
    %888 = vmatprep.mubr.f32.mxu0 0.0
    %889 = vmatmul.mubr.f32.gmra.mrb[0].mxu0 %v817
    %v890 = vpop.f32.mrb[0].mxu0
    %v891 = vadd.f32 %v812, %v890
    %v892 = vpop.f32.mrb[0].mxu0
    %893 = vdwg.mxu0
    %v894 = vmax.f32 %v886, 0.0
    %v895 = vmax.f32 %v891, 0.0
    %v896 = vlaneseq
    %v897 = vshrl.u32 %v896, 7
    %v898 = vsub.s32 0, %v897
    %v899 = vrot.slane %v751, %v898
    %vm900 = vcmask 523264
    %v902 = vsel %vm900, %v894, 0
    %v905 = vsel %vm900, %v895, 0
    %907 = vmatprep.subr.mxu0 0.0
    %908 = vmatpush1.msra.mxu0 %v758
    %909 = vmatprep.subr.mxu0 0.0
    %910 = vmatpush1.msra.mxu0 %v759
    %911 = vmatprep.subr.mxu0 0.0
    %912 = vmatpush1.msra.mxu0 %v760
    %913 = vmatprep.subr.mxu0 0.0
    %914 = vmatpush1.msra.mxu0 %v761
    %915 = vmatprep.subr.mxu0 0.0
    %916 = vmatpush1.msra.mxu0 %v762
    %917 = vmatprep.subr.mxu0 0.0
    %918 = vmatpush1.msra.mxu0 %v763
    %919 = vmatprep.subr.mxu0 0.0
    %920 = vmatpush1.msra.mxu0 %v764
    %921 = vmatprep.subr.mxu0 0.0
    %922 = vmatpush1.msra.mxu0 %v765
    %923 = vmatprep.subr.mxu0 0.0
    %924 = vmatpush1.msra.mxu0 0.0
    %925 = vmatprep.subr.mxu0 0.0
    %926 = vmatpush1.msra.mxu0 0.0
    %927 = vmatprep.subr.mxu0 0.0
    %928 = vmatpush1.msra.mxu0 0.0
    %929 = vmatprep.subr.mxu0 0.0
    %930 = vmatpush1.msra.mxu0 0.0
    %931 = vmatprep.subr.mxu0 0.0
    %932 = vmatpush1.msra.mxu0 0.0
    %933 = vmatprep.subr.mxu0 0.0
    %934 = vmatpush1.msra.mxu0 0.0
    %935 = vmatprep.subr.mxu0 0.0
    %936 = vmatpush1.msra.mxu0 0.0
    %937 = vmatprep.subr.mxu0 0.0
    %938 = vmatpush1.msra.mxu0 0.0
    %939 = vmatprep.subr.mxu0 0.0
    %940 = vmatpush1.msra.mxu0 0.0
    %941 = vmatprep.subr.mxu0 0.0
    %942 = vmatpush1.msra.mxu0 0.0
    %943 = vmatprep.subr.mxu0 0.0
    %944 = vmatpush1.msra.mxu0 0.0
    %945 = vmatprep.subr.mxu0 0.0
    %946 = vmatpush1.msra.mxu0 0.0
    %947 = vmatprep.subr.mxu0 0.0
    %948 = vmatpush1.msra.mxu0 0.0
    %949 = vmatprep.subr.mxu0 0.0
    %950 = vmatpush1.msra.mxu0 0.0
    %951 = vmatprep.subr.mxu0 0.0
    %952 = vmatpush1.msra.mxu0 0.0
    %953 = vmatprep.subr.mxu0 0.0
    %954 = vmatpush1.msra.mxu0 0.0
    %955 = vmatprep.subr.mxu0 0.0
    %956 = vmatpush1.msra.mxu0 0.0
    %957 = vmatprep.subr.mxu0 0.0
    %958 = vmatpush1.msra.mxu0 0.0
    %959 = vmatprep.subr.mxu0 0.0
    %960 = vmatpush1.msra.mxu0 0.0
    %961 = vmatprep.subr.mxu0 0.0
    %962 = vmatpush1.msra.mxu0 0.0
    %963 = vmatprep.subr.mxu0 0.0
    %964 = vmatpush1.msra.mxu0 0.0
    %965 = vmatprep.subr.mxu0 0.0
    %966 = vmatpush1.msra.mxu0 0.0
    %967 = vmatprep.subr.mxu0 0.0
    %968 = vmatpush1.msra.mxu0 0.0
    %969 = vmatprep.subr.mxu0 0.0
    %970 = vmatpush1.msra.mxu0 0.0
    %971 = vmatprep.mubr.f32.mxu0 0.0
    %972 = vmatmul.mubr.f32.gmra.mrb[0].mxu0 %v902
    %v973 = vpop.f32.mrb[0].mxu0
    %v974 = vadd.f32 %v899, %v973
    %v975 = vpop.f32.mrb[0].mxu0
    %976 = vmatprep.mubr.f32.mxu0 0.0
    %977 = vmatmul.mubr.f32.gmra.mrb[0].mxu0 %v905
    %v978 = vpop.f32.mrb[0].mxu0
    %v979 = vadd.f32 %v899, %v978
    %v980 = vpop.f32.mrb[0].mxu0
    %981 = vdwg.mxu0
    %v982 = vadd.f32 %v807, %v974
    %v983 = vadd.f32 %v808, %v979
    %v984 = vsel %vm33, %v982, 0.0
    %985 = vadd.xlane.f32.xlu0 %v984
    %v986 = vpop.xlane.xlu0 %985
    %v987 = vsel %vm33, %v983, 0.0
    %988 = vadd.xlane.f32.xlu0 %v987
    %v989 = vpop.xlane.xlu0 %988
    %v990 = vmul.f32 %v986, %v776
    %v991 = vmul.f32 %v989, %v776
    %v992 = vsub.f32 %v982, %v990
    %v993 = vsub.f32 %v983, %v991
    %v994 = vmul.f32 %v992, %v992
    %v995 = vmul.f32 %v993, %v993
    %v996 = vsel %vm33, %v994, 0.0
    %997 = vadd.xlane.f32.xlu0 %v996
    %v998 = vpop.xlane.xlu0 %997
    %v999 = vsel %vm33, %v995, 0.0
    %1000 = vadd.xlane.f32.xlu0 %v999
    %v1001 = vpop.xlane.xlu0 %1000
    %v1002 = vmul.f32 %v998, %v776
    %v1003 = vmul.f32 %v1001, %v776
    %v1004 = vadd.f32 %v1002, 1e-05
    %v1005 = vadd.f32 %v1003, 1e-05
    %v1006 = vrsqrt.pop %v1004
    %v1007 = vrsqrt.pop %v1005
    %v1008 = vmul.f32 %v992, %v1006
    %v1009 = vmul.f32 %v993, %v1007
    %v1010 = vlaneseq
    %v1011 = vshrl.u32 %v1010, 7
    %v1012 = vsub.s32 0, %v1011
    %v1013 = vrot.slane %v752, %v1012
    %v1014 = vmul.f32 %v1008, %v1013
    %v1015 = vmul.f32 %v1009, %v1013
    %v1016 = vlaneseq
    %v1017 = vshrl.u32 %v1016, 7
    %v1018 = vsub.s32 0, %v1017
    %v1019 = vrot.slane %v753, %v1018
    %v1020 = vadd.f32 %v1014, %v1019
    %v1021 = vadd.f32 %v1015, %v1019
    %1022 = vst.msk [vmem:[%s4] sm:$0xff] %vm33, %v1020
    %1023 = vst.msk [vmem:[%s4 + $0x8] sm:$0xff] %vm33, %v1021
    %v1024 = vmax.f32 %v429, %v431
    %v1025 = vmax.f32 %v437, %v439
    %v1026 = vmax.f32 %v1024, %v433
    %v1027 = vmax.f32 %v1025, %v441
    %v1028 = vmax.f32 %v1026, %v435
    %v1029 = vmax.f32 %v1027, %v443
    %v1030 = vld [vmem:[%s2] sm:$0xff]
    %v1031 = vld [vmem:[%s2 + $0x8] sm:$0xff]
    %vm1032 = vcmp.ne.s32.totalorder %v1030, 3
    %vm1033 = vcmp.ne.s32.totalorder %v1031, 3
    %v1034 = vsel %vm1032, 1, 0
    %v1035 = vsel %vm1033, 1, 0
    %v1036 = vcvt.s32.f32 %v1034
    %v1037 = vcvt.s32.f32 %v1035
    %vm1038 = vcmp.eq.s32.totalorder %v1030, 0
    %vm1039 = vcmp.eq.s32.totalorder %v1031, 0
    %v1040 = vlog2.pop %v1028
    %v1041 = vmul.f32 %v1040, 0.6931472
    %v1042 = vlog2.pop %v1029
    %v1043 = vmul.f32 %v1042, 0.6931472
    %v1044 = vmax.f32 %v1041, -100.0
    %v1045 = vmax.f32 %v1043, -100.0
    %v1046 = vsub.f32 1.0, %v1028
    %v1047 = vsub.f32 1.0, %v1029
    %v1048 = vlog2.pop %v1046
    %v1049 = vmul.f32 %v1048, 0.6931472
    %v1050 = vlog2.pop %v1047
    %v1051 = vmul.f32 %v1050, 0.6931472
    %v1052 = vmax.f32 %v1049, -100.0
    %v1053 = vmax.f32 %v1051, -100.0
    %v1054 = vmul.f32 %v1036, %v1044
    %v1055 = vmul.f32 %v1037, %v1045
    %v1056 = vsub.f32 1.0, %v1036
    %v1057 = vsub.f32 1.0, %v1037
    %v1058 = vmul.f32 %v1056, %v1052
    %v1059 = vmul.f32 %v1057, %v1053
    %v1060 = vadd.f32 %v1054, %v1058
    %v1061 = vadd.f32 %v1055, %v1059
    %v1062 = vsub.f32 0.0, %v1060
    %v1063 = vsub.f32 0.0, %v1061
    %v1064 = vsel %vm1038, 0.0, %v1062
    %v1065 = vsel %vm1039, 0.0, %v1063
    %v1066 = vsel %vm355, %v1064, 0.0
    %1067 = vadd.xlane.f32.xlu0 %v1066
    %v1068 = vpop.xlane.xlu0 %1067
    %v1069 = vrot.slane %v1068, 4
    %v1070 = vadd.f32 %v1068, %v1069
    %v1071 = vrot.slane %v1070, 2
    %v1072 = vadd.f32 %v1070, %v1071
    %v1073 = vrot.slane %v1072, 1
    %v1074 = vadd.f32 %v1072, %v1073
    %v1075 = vsel %vm355, %v1065, 0.0
    %1076 = vadd.xlane.f32.xlu0 %v1075
    %v1077 = vpop.xlane.xlu0 %1076
    %v1078 = vrot.slane %v1077, 4
    %v1079 = vadd.f32 %v1077, %v1078
    %v1080 = vrot.slane %v1079, 2
    %v1081 = vadd.f32 %v1079, %v1080
    %v1082 = vrot.slane %v1081, 1
    %v1083 = vadd.f32 %v1081, %v1082
    %vm1084 = vcmask 7168
    %v1085 = vsel %vm1084, %v1074, %v1083
    %vm1086 = vcmask 8192
    %1087 = vst.msk [vmem:[#allocation2] sm:$0x1] %vm1086, %v1085
    // Predicated region
    $region18: #{_lambda_.1} parent=1 // pred_check
      _
    $region19: #{_lambda_.1} parent=1 // pred_check_branch
      %1089 = sbr.rel (0) target = $region21
    $region20: #{_lambda_.1} parent=1 // pred_region
      _
    $region21: #{_lambda_.1} parent=1 // pred_fallthru
      _
    // Predicated region
    $region22: #{_lambda_.1} parent=1 // pred_check
      _
    $region23: #{_lambda_.1} parent=1 // pred_check_branch
      %1091 = sbr.rel (0) target = $region25
    $region24: #{_lambda_.1} parent=1 // pred_region
      %s1093 = ssub.s32 16, 16
      %1094 = vsyncadd [#allocation3], %s1093
      %s1096 = sshll.u32 [#allocation2], 4
      %s1097 = int_to_ptr.vmem [resolvable:$true] %s1096
      %1099 = dma.vmem_to_hbm [thread:$0]  %s1097, 16, %s5, [#allocation3]
    $region25: #{_lambda_.1} parent=1 // pred_fallthru
      _
    // Predicated region
    $region26: #{_lambda_.1} parent=1 // pred_check
      _
    $region27: #{_lambda_.1} parent=1 // pred_check_branch
      %1101 = sbr.rel (0) target = $region29
    $region28: #{_lambda_.1} parent=1 // pred_region
      _
    $region29: #{_lambda_.1} parent=1 // pred_fallthru
      _
    // Predicated region
    $region30: #{_lambda_.1} parent=1 // pred_check
      _
    $region31: #{_lambda_.1} parent=1 // pred_check_branch
      %1103 = sbr.rel (0) target = $region33
    $region32: #{_lambda_.1} parent=1 // pred_region
      %1104 = dma.done [#allocation3], 16
    $region33: #{_lambda_.1} parent=1 // pred_fallthru
      _
    %1105 = vsyncpa [#allocation3], 1

</llo_original>
